<compile_context>
chip_gen: v7x
topology: tpu7x:2x2x1
jax: 0.10.0
libtpu: 0.0.40
codegen_flags: <defaults>
</compile_context>

<pallas_src>
import functools

import jax
import jax.numpy as jnp
from jax import lax
from jax.experimental import pallas as pl
from jax.experimental.pallas import tpu as pltpu


def basic_block_kernel(x_ref, w1_ref, s1_ref, b1_ref, w2_ref, s2_ref, b2_ref,
                       out_ref, unf, *, stacked):
    # Per grid step n (one batch image):
    #   x_ref  : (1, H, W, C)   bf16 input (also the residual branch)
    #   w1_ref : stacked -> (3C, 3C) bf16, else (3, 3C, C) bf16
    #   s1/b1  : (1, C)         f32 folded BN1 scale / bias
    #   w2_ref : same layout as w1_ref
    #   s2/b2  : (1, C)         f32 folded BN2 scale / bias
    #   out_ref: (1, H, W, C)   bf16
    #   unf    : (H+2, W, 3C)   bf16 VMEM scratch = kw-unfolded conv input,
    #                           reused for conv1 and conv2.
    H = out_ref.shape[1]
    W = out_ref.shape[2]
    C = x_ref.shape[3]          # Cin == Cout (asserted in the wrapper)
    HW = H * W

    # --- halo: only the elements the interior tap-stores never overwrite ---
    # (2 wide pad rows + 2 thin masked column lane-groups; everything else of
    #  the scratch is fully rewritten below, every step -> no stale data.)
    unf[0:1, :, :] = jnp.zeros((1, W, 3 * C), unf.dtype)                 # image row -1
    unf[H + 1:H + 2, :, :] = jnp.zeros((1, W, 3 * C), unf.dtype)         # image row H
    unf[1:H + 1, 0:1, 0:C] = jnp.zeros((H, 1, C), unf.dtype)             # kw=0 tap, w=0
    unf[1:H + 1, W - 1:W, 2 * C:3 * C] = jnp.zeros((H, 1, C), unf.dtype)  # kw=2 tap, w=W-1

    def fill_unfolded(v):
        # v: (H, W, C) bf16.  unf[h+1, w, kw*C + c] = v[h, w-1+kw, c] (zero-padded).
        unf[1:H + 1, 1:W, 0:C] = v[:, 0:W - 1, :]            # kw = 0 tap
        unf[1:H + 1, 0:W, C:2 * C] = v                       # kw = 1 tap
        unf[1:H + 1, 0:W - 1, 2 * C:3 * C] = v[:, 1:W, :]    # kw = 2 tap

    def conv3x3(w_ref):
        a = unf[...].reshape((H + 2) * W, 3 * C)              # contiguous slab view
        if stacked:
            # One MXU pass with the three kh weight blocks stacked along N,
            # then combine the Cout lane groups at row offsets 0 / W / 2W.
            big = jnp.dot(a, w_ref[...], preferred_element_type=jnp.float32)
            acc = (big[0:HW, 0:C]
                   + big[W:W + HW, C:2 * C]
                   + big[2 * W:2 * W + HW, 2 * C:3 * C])
        else:
            # Three matmuls with K = 3*C over contiguous kh row slabs;
            # accumulator initialised from the first matmul (no zeros+add).
            acc = jnp.dot(a[0:HW, :], w_ref[0],
                          preferred_element_type=jnp.float32)
            for kh in (1, 2):
                acc = acc + jnp.dot(a[kh * W:kh * W + HW, :], w_ref[kh],
                                    preferred_element_type=jnp.float32)
        return acc                                             # (H*W, C) f32

    # conv1 -> bn1 -> relu           (BN / ReLU in f32)
    fill_unfolded(x_ref[0])
    y = conv3x3(w1_ref) * s1_ref[0] + b1_ref[0]
    y = jnp.maximum(y, 0.0)

    # conv2 -> bn2 -> +x -> relu     (scratch reused; residual re-read late, f32 add)
    fill_unfolded(y.reshape(H, W, C).astype(unf.dtype))
    z = conv3x3(w2_ref) * s2_ref[0] + b2_ref[0]
    z = z.reshape(H, W, C) + x_ref[0].astype(jnp.float32)
    out_ref[0] = jnp.maximum(z, 0.0).astype(out_ref.dtype)


def basic_block_pallas(x_nhwc, w1_hwio, scale1, bias1, w2_hwio, scale2, bias2,
                       *, stack_kh=None):
    """x_nhwc: (N, H, W, C) float; w*_hwio: (3, 3, C, C). Returns (N, H, W, C) bf16."""
    N, H, W, Cin = x_nhwc.shape
    Cout = w1_hwio.shape[-1]
    assert Cin == Cout, "stride=1 / no-downsample BasicBlock requires inplanes == planes"
    C = Cout
    if stack_kh is None:
        # Stacking pays whenever Cout under-fills the MXU output width (v6e/v7x: 256).
        stack_kh = (C % 256) != 0

    x = x_nhwc.astype(jnp.bfloat16)                       # bf16 HBM I/O

    # (3, 3, Cin, Cout) -> (3, 3*Cin, Cout): contraction index kw*Cin + ci per kh.
    w1m = w1_hwio.reshape(3, 3 * C, C).astype(jnp.bfloat16)
    w2m = w2_hwio.reshape(3, 3 * C, C).astype(jnp.bfloat16)
    if stack_kh:
        # (3, 3C, C) -> (3C, 3C): the three kh blocks side by side along N.
        w1m = jnp.transpose(w1m, (1, 0, 2)).reshape(3 * C, 3 * C)
        w2m = jnp.transpose(w2m, (1, 0, 2)).reshape(3 * C, 3 * C)
        w_spec = pl.BlockSpec((3 * C, 3 * C), lambda n: (0, 0))
    else:
        w_spec = pl.BlockSpec((3, 3 * C, C), lambda n: (0, 0, 0))

    s1 = scale1.reshape(1, C).astype(jnp.float32)
    b1 = bias1.reshape(1, C).astype(jnp.float32)
    s2 = scale2.reshape(1, C).astype(jnp.float32)
    b2 = bias2.reshape(1, C).astype(jnp.float32)
    sb_spec = pl.BlockSpec((1, C), lambda n: (0, 0))

    kernel = functools.partial(basic_block_kernel, stacked=stack_kh)

    return pl.pallas_call(
        kernel,
        out_shape=jax.ShapeDtypeStruct((N, H, W, C), jnp.bfloat16),
        grid_spec=pltpu.PrefetchScalarGridSpec(
            num_scalar_prefetch=0,
            grid=(N,),
            in_specs=[
                pl.BlockSpec((1, H, W, C), lambda n: (n, 0, 0, 0)),
                w_spec, sb_spec, sb_spec,
                w_spec, sb_spec, sb_spec,
            ],
            out_specs=pl.BlockSpec((1, H, W, C), lambda n: (n, 0, 0, 0)),
            scratch_shapes=[
                pltpu.VMEM((H + 2, W, 3 * C), jnp.bfloat16),
            ],
        ),
        compiler_params=pltpu.CompilerParams(
            dimension_semantics=("parallel",),
            # Explicit budget (real ResNet shapes must fit v7x's 64 MiB VMEM).
            vmem_limit_bytes=64 * 1024 * 1024,
        ),
    )(x, w1m, s1, b1, w2m, s2, b2)


def reference_basic_block(x_nhwc, w1_hwio, scale1, bias1, w2_hwio, scale2, bias2):
    """Pure-JAX f32 reference using lax.conv (NHWC / HWIO)."""
    dn = lax.conv_dimension_numbers(x_nhwc.shape, w1_hwio.shape,
                                    ("NHWC", "HWIO", "NHWC"))
    out = lax.conv_general_dilated(x_nhwc, w1_hwio, (1, 1), "SAME",
                                   dimension_numbers=dn)
    out = out * scale1 + bias1
    out = jnp.maximum(out, 0.0)
    out = lax.conv_general_dilated(out, w2_hwio, (1, 1), "SAME",
                                   dimension_numbers=dn)
    out = out * scale2 + bias2
    out = out + x_nhwc
    return jnp.maximum(out, 0.0)


if __name__ == "__main__":
    # Small shapes: batch=2, inplanes=planes=4, spatial 16x16 (NCHW like PyTorch).
    # NOTE: real tuning (tile sizes, kh-stacking, buffering) should be done at
    # actual ResNet BasicBlock shapes (56x56x64 ... 7x7x512).
    N, C, H, W = 2, 4, 16, 16
    key = jax.random.PRNGKey(0)
    kx, kw1, kw2, kg1, kb1, km1, kv1, kg2, kb2, km2, kv2 = jax.random.split(key, 11)

    x_nchw = jax.random.normal(kx, (N, C, H, W), jnp.float32)

    # Conv weights in PyTorch layout (Cout, Cin, kH, kW), then -> HWIO.
    w1_oihw = jax.random.normal(kw1, (C, C, 3, 3), jnp.float32) * 0.1
    w2_oihw = jax.random.normal(kw2, (C, C, 3, 3), jnp.float32) * 0.1
    w1_hwio = jnp.transpose(w1_oihw, (2, 3, 1, 0))
    w2_hwio = jnp.transpose(w2_oihw, (2, 3, 1, 0))

    eps = 1e-5
    # BatchNorm2d parameters + running stats (inference-mode fold).
    gamma1 = 1.0 + 0.1 * jax.random.normal(kg1, (C,), jnp.float32)
    beta1 = 0.1 * jax.random.normal(kb1, (C,), jnp.float32)
    mean1 = 0.1 * jax.random.normal(km1, (C,), jnp.float32)
    var1 = jnp.abs(jax.random.normal(kv1, (C,), jnp.float32)) + 0.5
    gamma2 = 1.0 + 0.1 * jax.random.normal(kg2, (C,), jnp.float32)
    beta2 = 0.1 * jax.random.normal(kb2, (C,), jnp.float32)
    mean2 = 0.1 * jax.random.normal(km2, (C,), jnp.float32)
    var2 = jnp.abs(jax.random.normal(kv2, (C,), jnp.float32)) + 0.5

    scale1 = gamma1 / jnp.sqrt(var1 + eps)
    bias1 = beta1 - mean1 * scale1
    scale2 = gamma2 / jnp.sqrt(var2 + eps)
    bias2 = beta2 - mean2 * scale2

    # NCHW -> NHWC for the kernel.
    x_nhwc = jnp.transpose(x_nchw, (0, 2, 3, 1))

    # Reference fed the same bf16-quantised activations the kernel sees at HBM
    # (bf16 I/O + bf16 MXU inputs, f32 accumulation -> loosened tolerance).
    x_q = x_nhwc.astype(jnp.bfloat16).astype(jnp.float32)
    ref = reference_basic_block(x_q, w1_hwio, scale1, bias1,
                                w2_hwio, scale2, bias2)

    out_nhwc = None
    for stack in (True, False):   # exercise both conv formulations
        out_nhwc = basic_block_pallas(x_nhwc, w1_hwio, scale1, bias1,
                                      w2_hwio, scale2, bias2, stack_kh=stack)
        out_nhwc = jax.block_until_ready(out_nhwc).astype(jnp.float32)
        assert out_nhwc.shape == (N, H, W, C)
        assert jnp.allclose(out_nhwc, ref, atol=5e-2, rtol=5e-2), \
            f"mismatch vs JAX reference (stack_kh={stack})"

    # Back to PyTorch layout (NCHW) just to mirror module output convention.
    out_nchw = jnp.transpose(out_nhwc, (0, 3, 1, 2))
    assert out_nchw.shape == (N, C, H, W)

    print("KERNEL_OK")
</pallas_src>

<mosaic_0001>
module attributes {stable_mosaic.version = 11 : i64} {
  func.func @basic_block_kernel(%arg0: i32, %arg1: memref<1x16x16x4xbf16, #tpu.memory_space<vmem>>, %arg2: memref<12x12xbf16, #tpu.memory_space<vmem>>, %arg3: memref<1x4xf32, #tpu.memory_space<vmem>>, %arg4: memref<1x4xf32, #tpu.memory_space<vmem>>, %arg5: memref<12x12xbf16, #tpu.memory_space<vmem>>, %arg6: memref<1x4xf32, #tpu.memory_space<vmem>>, %arg7: memref<1x4xf32, #tpu.memory_space<vmem>>, %arg8: memref<1x16x16x4xbf16, #tpu.memory_space<vmem>>, %arg9: memref<18x16x12xbf16, #tpu.memory_space<vmem>>) attributes {dimension_semantics = [#tpu.dimension_semantics<parallel>], iteration_bounds = array<i64: 2>, scalar_prefetch = 0 : i64, scratch_operands = 1 : i64, tpu.core_type = #tpu.core_type<tc>, window_params = [{transform_indices = @transform_0, window_bounds = array<i64: 1, 16, 16, 4>}, {pipeline_mode = #tpu.pipeline_mode<synchronous>, transform_indices = @transform_1, window_bounds = array<i64: 12, 12>}, {pipeline_mode = #tpu.pipeline_mode<synchronous>, transform_indices = @transform_2, window_bounds = array<i64: 1, 4>}, {pipeline_mode = #tpu.pipeline_mode<synchronous>, transform_indices = @transform_3, window_bounds = array<i64: 1, 4>}, {pipeline_mode = #tpu.pipeline_mode<synchronous>, transform_indices = @transform_4, window_bounds = array<i64: 12, 12>}, {pipeline_mode = #tpu.pipeline_mode<synchronous>, transform_indices = @transform_5, window_bounds = array<i64: 1, 4>}, {pipeline_mode = #tpu.pipeline_mode<synchronous>, transform_indices = @transform_6, window_bounds = array<i64: 1, 4>}, {transform_indices = @transform_7, window_bounds = array<i64: 1, 16, 16, 4>}]} {
    %cst = arith.constant 0.000000e+00 : bf16
    %0 = vector.broadcast %cst : bf16 to vector<1x16x12xbf16>
    %c0 = arith.constant 0 : index
    %c0_0 = arith.constant 0 : index
    %c0_1 = arith.constant 0 : index
    %1 = vector.load %arg9[%c0, %c0_0, %c0_1] : memref<18x16x12xbf16, #tpu.memory_space<vmem>>, vector<1x16x12xbf16>
    tpu.vector_store %arg9[%c0, %c0_0, %c0_1], %0 {strides = array<i32>} : memref<18x16x12xbf16, #tpu.memory_space<vmem>>, vector<1x16x12xbf16>,
    %cst_2 = arith.constant 0.000000e+00 : bf16
    %2 = vector.broadcast %cst_2 : bf16 to vector<1x16x12xbf16>
    %c17 = arith.constant 17 : index
    %c0_3 = arith.constant 0 : index
    %c0_4 = arith.constant 0 : index
    %3 = vector.load %arg9[%c17, %c0_3, %c0_4] : memref<18x16x12xbf16, #tpu.memory_space<vmem>>, vector<1x16x12xbf16>
    tpu.vector_store %arg9[%c17, %c0_3, %c0_4], %2 {strides = array<i32>} : memref<18x16x12xbf16, #tpu.memory_space<vmem>>, vector<1x16x12xbf16>,
    %cst_5 = arith.constant 0.000000e+00 : bf16
    %4 = vector.broadcast %cst_5 : bf16 to vector<16x1x4xbf16>
    %c1 = arith.constant 1 : index
    %c0_6 = arith.constant 0 : index
    %c0_7 = arith.constant 0 : index
    %5 = vector.load %arg9[%c1, %c0_6, %c0_7] : memref<18x16x12xbf16, #tpu.memory_space<vmem>>, vector<16x1x4xbf16>
    tpu.vector_store %arg9[%c1, %c0_6, %c0_7], %4 {strides = array<i32>} : memref<18x16x12xbf16, #tpu.memory_space<vmem>>, vector<16x1x4xbf16>,
    %cst_8 = arith.constant 0.000000e+00 : bf16
    %6 = vector.broadcast %cst_8 : bf16 to vector<16x1x4xbf16>
    %c1_9 = arith.constant 1 : index
    %c15 = arith.constant 15 : index
    %c8 = arith.constant 8 : index
    %7 = vector.load %arg9[%c1_9, %c15, %c8] : memref<18x16x12xbf16, #tpu.memory_space<vmem>>, vector<16x1x4xbf16>
    tpu.vector_store %arg9[%c1_9, %c15, %c8], %6 {strides = array<i32>} : memref<18x16x12xbf16, #tpu.memory_space<vmem>>, vector<16x1x4xbf16>,
    %c0_10 = arith.constant 0 : index
    %c0_11 = arith.constant 0 : index
    %c0_12 = arith.constant 0 : index
    %c0_13 = arith.constant 0 : index
    %8 = vector.load %arg1[%c0_10, %c0_11, %c0_12, %c0_13] : memref<1x16x16x4xbf16, #tpu.memory_space<vmem>>, vector<1x16x16x4xbf16>
    %9 = vector.shape_cast %8 : vector<1x16x16x4xbf16> to vector<16x16x4xbf16>
    %10 = vector.extract_strided_slice %9 {offsets = [0, 0, 0], sizes = [16, 15, 4], strides = [1, 1, 1]} : vector<16x16x4xbf16> to vector<16x15x4xbf16>
    %c1_14 = arith.constant 1 : index
    %c1_15 = arith.constant 1 : index
    %c0_16 = arith.constant 0 : index
    %11 = vector.load %arg9[%c1_14, %c1_15, %c0_16] : memref<18x16x12xbf16, #tpu.memory_space<vmem>>, vector<16x15x4xbf16>
    tpu.vector_store %arg9[%c1_14, %c1_15, %c0_16], %10 {strides = array<i32>} : memref<18x16x12xbf16, #tpu.memory_space<vmem>>, vector<16x15x4xbf16>,
    %c1_17 = arith.constant 1 : index
    %c0_18 = arith.constant 0 : index
    %c4 = arith.constant 4 : index
    %12 = vector.load %arg9[%c1_17, %c0_18, %c4] : memref<18x16x12xbf16, #tpu.memory_space<vmem>>, vector<16x16x4xbf16>
    tpu.vector_store %arg9[%c1_17, %c0_18, %c4], %9 {strides = array<i32>} : memref<18x16x12xbf16, #tpu.memory_space<vmem>>, vector<16x16x4xbf16>,
    %13 = vector.extract_strided_slice %9 {offsets = [0, 1, 0], sizes = [16, 15, 4], strides = [1, 1, 1]} : vector<16x16x4xbf16> to vector<16x15x4xbf16>
    %c1_19 = arith.constant 1 : index
    %c0_20 = arith.constant 0 : index
    %c8_21 = arith.constant 8 : index
    %14 = vector.load %arg9[%c1_19, %c0_20, %c8_21] : memref<18x16x12xbf16, #tpu.memory_space<vmem>>, vector<16x15x4xbf16>
    tpu.vector_store %arg9[%c1_19, %c0_20, %c8_21], %13 {strides = array<i32>} : memref<18x16x12xbf16, #tpu.memory_space<vmem>>, vector<16x15x4xbf16>,
    %c0_22 = arith.constant 0 : index
    %c0_23 = arith.constant 0 : index
    %c0_24 = arith.constant 0 : index
    %15 = vector.load %arg9[%c0_22, %c0_23, %c0_24] : memref<18x16x12xbf16, #tpu.memory_space<vmem>>, vector<18x16x12xbf16>
    %16 = vector.shape_cast %15 : vector<18x16x12xbf16> to vector<288x12xbf16>
    %c0_25 = arith.constant 0 : index
    %c0_26 = arith.constant 0 : index
    %17 = vector.load %arg2[%c0_25, %c0_26] : memref<12x12xbf16, #tpu.memory_space<vmem>>, vector<12x12xbf16>
    %cst_27 = arith.constant dense<0.000000e+00> : vector<288x12xf32>
    %18 = tpu.matmul %16, %17, %cst_27 {dimension_numbers = #tpu.dot_dimension_numbers<[1], [0], [0], [1], [0, 0, 1, 1], [], []>} : vector<288x12xbf16>, vector<12x12xbf16>, vector<288x12xf32> -> vector<288x12xf32>
    %19 = vector.extract_strided_slice %18 {offsets = [0, 0], sizes = [256, 4], strides = [1, 1]} : vector<288x12xf32> to vector<256x4xf32>
    %20 = vector.extract_strided_slice %18 {offsets = [16, 4], sizes = [256, 4], strides = [1, 1]} : vector<288x12xf32> to vector<256x4xf32>
    %21 = arith.addf %19, %20 : vector<256x4xf32>
    %22 = vector.extract_strided_slice %18 {offsets = [32, 8], sizes = [256, 4], strides = [1, 1]} : vector<288x12xf32> to vector<256x4xf32>
    %23 = arith.addf %21, %22 : vector<256x4xf32>
    %c0_28 = arith.constant 0 : index
    %c0_29 = arith.constant 0 : index
    %24 = vector.load %arg3[%c0_28, %c0_29] : memref<1x4xf32, #tpu.memory_space<vmem>>, vector<1x4xf32>
    %25 = vector.shape_cast %24 : vector<1x4xf32> to vector<4xf32>
    %26 = vector.shape_cast %25 : vector<4xf32> to vector<1x4xf32>
    %27 = vector.broadcast %26 : vector<1x4xf32> to vector<256x4xf32>
    %28 = arith.mulf %23, %27 : vector<256x4xf32>
    %c0_30 = arith.constant 0 : index
    %c0_31 = arith.constant 0 : index
    %29 = vector.load %arg4[%c0_30, %c0_31] : memref<1x4xf32, #tpu.memory_space<vmem>>, vector<1x4xf32>
    %30 = vector.shape_cast %29 : vector<1x4xf32> to vector<4xf32>
    %31 = vector.shape_cast %30 : vector<4xf32> to vector<1x4xf32>
    %32 = vector.broadcast %31 : vector<1x4xf32> to vector<256x4xf32>
    %33 = arith.addf %28, %32 : vector<256x4xf32>
    %cst_32 = arith.constant 0.000000e+00 : f32
    %34 = vector.broadcast %cst_32 : f32 to vector<256x4xf32>
    %35 = arith.maximumf %33, %34 : vector<256x4xf32>
    %36 = vector.shape_cast %35 : vector<256x4xf32> to vector<16x16x4xf32>
    %37 = arith.truncf %36 : vector<16x16x4xf32> to vector<16x16x4xbf16>
    %38 = vector.extract_strided_slice %37 {offsets = [0, 0, 0], sizes = [16, 15, 4], strides = [1, 1, 1]} : vector<16x16x4xbf16> to vector<16x15x4xbf16>
    %c1_33 = arith.constant 1 : index
    %c1_34 = arith.constant 1 : index
    %c0_35 = arith.constant 0 : index
    %39 = vector.load %arg9[%c1_33, %c1_34, %c0_35] : memref<18x16x12xbf16, #tpu.memory_space<vmem>>, vector<16x15x4xbf16>
    tpu.vector_store %arg9[%c1_33, %c1_34, %c0_35], %38 {strides = array<i32>} : memref<18x16x12xbf16, #tpu.memory_space<vmem>>, vector<16x15x4xbf16>,
    %c1_36 = arith.constant 1 : index
    %c0_37 = arith.constant 0 : index
    %c4_38 = arith.constant 4 : index
    %40 = vector.load %arg9[%c1_36, %c0_37, %c4_38] : memref<18x16x12xbf16, #tpu.memory_space<vmem>>, vector<16x16x4xbf16>
    tpu.vector_store %arg9[%c1_36, %c0_37, %c4_38], %37 {strides = array<i32>} : memref<18x16x12xbf16, #tpu.memory_space<vmem>>, vector<16x16x4xbf16>,
    %41 = vector.extract_strided_slice %37 {offsets = [0, 1, 0], sizes = [16, 15, 4], strides = [1, 1, 1]} : vector<16x16x4xbf16> to vector<16x15x4xbf16>
    %c1_39 = arith.constant 1 : index
    %c0_40 = arith.constant 0 : index
    %c8_41 = arith.constant 8 : index
    %42 = vector.load %arg9[%c1_39, %c0_40, %c8_41] : memref<18x16x12xbf16, #tpu.memory_space<vmem>>, vector<16x15x4xbf16>
    tpu.vector_store %arg9[%c1_39, %c0_40, %c8_41], %41 {strides = array<i32>} : memref<18x16x12xbf16, #tpu.memory_space<vmem>>, vector<16x15x4xbf16>,
    %c0_42 = arith.constant 0 : index
    %c0_43 = arith.constant 0 : index
    %c0_44 = arith.constant 0 : index
    %43 = vector.load %arg9[%c0_42, %c0_43, %c0_44] : memref<18x16x12xbf16, #tpu.memory_space<vmem>>, vector<18x16x12xbf16>
    %44 = vector.shape_cast %43 : vector<18x16x12xbf16> to vector<288x12xbf16>
    %c0_45 = arith.constant 0 : index
    %c0_46 = arith.constant 0 : index
    %45 = vector.load %arg5[%c0_45, %c0_46] : memref<12x12xbf16, #tpu.memory_space<vmem>>, vector<12x12xbf16>
    %cst_47 = arith.constant dense<0.000000e+00> : vector<288x12xf32>
    %46 = tpu.matmul %44, %45, %cst_47 {dimension_numbers = #tpu.dot_dimension_numbers<[1], [0], [0], [1], [0, 0, 1, 1], [], []>} : vector<288x12xbf16>, vector<12x12xbf16>, vector<288x12xf32> -> vector<288x12xf32>
    %47 = vector.extract_strided_slice %46 {offsets = [0, 0], sizes = [256, 4], strides = [1, 1]} : vector<288x12xf32> to vector<256x4xf32>
    %48 = vector.extract_strided_slice %46 {offsets = [16, 4], sizes = [256, 4], strides = [1, 1]} : vector<288x12xf32> to vector<256x4xf32>
    %49 = arith.addf %47, %48 : vector<256x4xf32>
    %50 = vector.extract_strided_slice %46 {offsets = [32, 8], sizes = [256, 4], strides = [1, 1]} : vector<288x12xf32> to vector<256x4xf32>
    %51 = arith.addf %49, %50 : vector<256x4xf32>
    %c0_48 = arith.constant 0 : index
    %c0_49 = arith.constant 0 : index
    %52 = vector.load %arg6[%c0_48, %c0_49] : memref<1x4xf32, #tpu.memory_space<vmem>>, vector<1x4xf32>
    %53 = vector.shape_cast %52 : vector<1x4xf32> to vector<4xf32>
    %54 = vector.shape_cast %53 : vector<4xf32> to vector<1x4xf32>
    %55 = vector.broadcast %54 : vector<1x4xf32> to vector<256x4xf32>
    %56 = arith.mulf %51, %55 : vector<256x4xf32>
    %c0_50 = arith.constant 0 : index
    %c0_51 = arith.constant 0 : index
    %57 = vector.load %arg7[%c0_50, %c0_51] : memref<1x4xf32, #tpu.memory_space<vmem>>, vector<1x4xf32>
    %58 = vector.shape_cast %57 : vector<1x4xf32> to vector<4xf32>
    %59 = vector.shape_cast %58 : vector<4xf32> to vector<1x4xf32>
    %60 = vector.broadcast %59 : vector<1x4xf32> to vector<256x4xf32>
    %61 = arith.addf %56, %60 : vector<256x4xf32>
    %62 = vector.shape_cast %61 : vector<256x4xf32> to vector<16x16x4xf32>
    %c0_52 = arith.constant 0 : index
    %c0_53 = arith.constant 0 : index
    %c0_54 = arith.constant 0 : index
    %c0_55 = arith.constant 0 : index
    %63 = vector.load %arg1[%c0_52, %c0_53, %c0_54, %c0_55] : memref<1x16x16x4xbf16, #tpu.memory_space<vmem>>, vector<1x16x16x4xbf16>
    %64 = vector.shape_cast %63 : vector<1x16x16x4xbf16> to vector<16x16x4xbf16>
    %65 = arith.extf %64 : vector<16x16x4xbf16> to vector<16x16x4xf32>
    %66 = arith.addf %62, %65 : vector<16x16x4xf32>
    %cst_56 = arith.constant 0.000000e+00 : f32
    %67 = vector.broadcast %cst_56 : f32 to vector<16x16x4xf32>
    %68 = arith.maximumf %66, %67 : vector<16x16x4xf32>
    %69 = arith.truncf %68 : vector<16x16x4xf32> to vector<16x16x4xbf16>
    %c0_57 = arith.constant 0 : index
    %c0_58 = arith.constant 0 : index
    %c0_59 = arith.constant 0 : index
    %c0_60 = arith.constant 0 : index
    %70 = vector.load %arg8[%c0_57, %c0_58, %c0_59, %c0_60] : memref<1x16x16x4xbf16, #tpu.memory_space<vmem>>, vector<1x16x16x4xbf16>
    %71 = vector.shape_cast %70 : vector<1x16x16x4xbf16> to vector<16x16x4xbf16>
    %72 = vector.shape_cast %69 : vector<16x16x4xbf16> to vector<1x16x16x4xbf16>
    tpu.vector_store %arg8[%c0_57, %c0_58, %c0_59, %c0_60], %72 {strides = array<i32>} : memref<1x16x16x4xbf16, #tpu.memory_space<vmem>>, vector<1x16x16x4xbf16>,
    return
  }
  func.func @transform_0(%arg0: i32) -> (i32, i32, i32, i32) {
    %c0_i32 = arith.constant 0 : i32
    %c0_i32_0 = arith.constant 0 : i32
    %c0_i32_1 = arith.constant 0 : i32
    %c0_i32_2 = arith.constant 0 : i32
    return %arg0, %c0_i32, %c0_i32_0, %c0_i32_1 : i32, i32, i32, i32
  }
  func.func @transform_1(%arg0: i32) -> (i32, i32) {
    %c0_i32 = arith.constant 0 : i32
    %c0_i32_0 = arith.constant 0 : i32
    %c0_i32_1 = arith.constant 0 : i32
    return %c0_i32, %c0_i32_0 : i32, i32
  }
  func.func @transform_2(%arg0: i32) -> (i32, i32) {
    %c0_i32 = arith.constant 0 : i32
    %c0_i32_0 = arith.constant 0 : i32
    %c0_i32_1 = arith.constant 0 : i32
    return %c0_i32, %c0_i32_0 : i32, i32
  }
  func.func @transform_3(%arg0: i32) -> (i32, i32) {
    %c0_i32 = arith.constant 0 : i32
    %c0_i32_0 = arith.constant 0 : i32
    %c0_i32_1 = arith.constant 0 : i32
    return %c0_i32, %c0_i32_0 : i32, i32
  }
  func.func @transform_4(%arg0: i32) -> (i32, i32) {
    %c0_i32 = arith.constant 0 : i32
    %c0_i32_0 = arith.constant 0 : i32
    %c0_i32_1 = arith.constant 0 : i32
    return %c0_i32, %c0_i32_0 : i32, i32
  }
  func.func @transform_5(%arg0: i32) -> (i32, i32) {
    %c0_i32 = arith.constant 0 : i32
    %c0_i32_0 = arith.constant 0 : i32
    %c0_i32_1 = arith.constant 0 : i32
    return %c0_i32, %c0_i32_0 : i32, i32
  }
  func.func @transform_6(%arg0: i32) -> (i32, i32) {
    %c0_i32 = arith.constant 0 : i32
    %c0_i32_0 = arith.constant 0 : i32
    %c0_i32_1 = arith.constant 0 : i32
    return %c0_i32, %c0_i32_0 : i32, i32
  }
  func.func @transform_7(%arg0: i32) -> (i32, i32, i32, i32) {
    %c0_i32 = arith.constant 0 : i32
    %c0_i32_0 = arith.constant 0 : i32
    %c0_i32_1 = arith.constant 0 : i32
    %c0_i32_2 = arith.constant 0 : i32
    return %arg0, %c0_i32, %c0_i32_0, %c0_i32_1 : i32, i32, i32, i32
  }
}

</mosaic_0001>

<llo_original>
// kernel: tpu_custom_call.1
$region0: #{tpu_custom_call.1}
  #allocation0 [shape = 'u32[]', space=smem, size = 0x4, offset = 0x4, fixed_abs, tag = 'smem constant byte address 0x4 - core index']
  #allocation1 [shape = 'u32[144,128]{1,0:T(1,128)}', space=vmem, size = 0x12000, scoped, tag = 'internal scratch']
  #allocation2 [shape = 'bf16[18,16,12]{2,1,0:T(16,128)(2,1)}', space=vmem, size = 0x12000, scoped, tag = 'scratch operand']
  %s0 = inlined_call_operand.hbm [shape: bf16[2,16,16,4], index: 0, kind: input, shape index: {}]
  %s1 = inlined_call_operand.hbm [shape: bf16[12,12], index: 1, kind: input, shape index: {}]
  %s2 = inlined_call_operand.hbm [shape: f32[1,4], index: 2, kind: input, shape index: {}]
  %s3 = inlined_call_operand.hbm [shape: f32[1,4], index: 3, kind: input, shape index: {}]
  %s4 = inlined_call_operand.hbm [shape: bf16[12,12], index: 4, kind: input, shape index: {}]
  %s5 = inlined_call_operand.hbm [shape: f32[1,4], index: 5, kind: input, shape index: {}]
  %s6 = inlined_call_operand.hbm [shape: f32[1,4], index: 6, kind: input, shape index: {}]
  %s7 = inlined_call_operand.hbm [shape: bf16[2,16,16,4], index: 7, kind: output, shape index: {}]
  %s8 = sld [smem:[#allocation0]]
  $region89: #{tpu_custom_call.1} parent=0
    _
  %s10 = ssub.s32 1, %s8
  %s11 = scalar_select 0, %s10, %s8
  $region1: #{tpu_custom_call.1} parent=0
    #allocation3 [shape = 'u8[131072]{0}', space=vmem, size = 0x20000, scoped, tag = 'input window, operand 0']
    #allocation4 [shape = 's32[2]{0}', space=sflag, size = 0x8, scoped, tag = 'scoped memory for tpu_custom_call.1']
    #allocation5 [shape = 's32[2]{0}', space=sflag, size = 0x8, scoped, tag = 'scoped memory for tpu_custom_call.1']
    #allocation6 [shape = 'u8[4096]{0}', space=vmem, size = 0x1000, scoped, tag = 'input window, operand 1, single buffered']
    #allocation7 [shape = 's32[1]{0}', space=sflag, size = 0x4, scoped, tag = 'scoped memory for tpu_custom_call.1']
    #allocation8 [shape = 'u8[512]{0}', space=vmem, size = 0x400, scoped, tag = 'input window, operand 2, single buffered']
    #allocation9 [shape = 'u8[512]{0}', space=vmem, size = 0x400, scoped, tag = 'input window, operand 3, single buffered']
    #allocation10 [shape = 's32[1]{0}', space=sflag, size = 0x4, scoped, tag = 'scoped memory for tpu_custom_call.1']
    #allocation11 [shape = 'u8[4096]{0}', space=vmem, size = 0x1000, scoped, tag = 'input window, operand 4, single buffered']
    #allocation12 [shape = 'u8[512]{0}', space=vmem, size = 0x400, scoped, tag = 'input window, operand 5, single buffered']
    #allocation13 [shape = 's32[1]{0}', space=sflag, size = 0x4, scoped, tag = 'scoped memory for tpu_custom_call.1']
    #allocation14 [shape = 'u8[512]{0}', space=vmem, size = 0x400, scoped, tag = 'input window, operand 6, single buffered']
    #allocation15 [shape = 'u8[131072]{0}', space=vmem, size = 0x20000, scoped, tag = 'output window, operand 0']
    %12 = vsyncpa [#allocation4], 0
    %s13 = scalar_lea.sflag [#allocation4], 1
    %14 = vsyncpa %s13, 0
    %15 = vsyncpa [#allocation7], 0
    %16 = vsyncpa [#allocation10], 0
    %17 = vsyncpa [#allocation13], 0
    %18 = vsyncpa [#allocation5], 0
    %s19 = scalar_lea.sflag [#allocation5], 1
    %20 = vsyncpa %s19, 0
    loop: start=0, step=1, limit=4
    $region2: #{tpu_custom_call.1} parent=1 // loop_pre_header
      _
    $region3: #{tpu_custom_call.1} parent=1 // loop_header
      %s22 = sphi 0, %s26
      %p23 = scmp.ge.s32.totalorder %s22, 4
      %s32 = sphi 0, %s34
      %s35 = sphi 0, %s32
      %s36 = sphi 0, %s35
      %s52 = sphi 0, %s36
      %s56 = sphi 0, %s56
      %s58 = sphi 0, %s56
      %s59 = sphi 0, %s58
      %s73 = sphi 0, %s59
      %s77 = sphi 0, %s77
      %s79 = sphi 0, %s77
      %s80 = sphi 0, %s79
      %s94 = sphi 0, %s80
      %s98 = sphi 0, %s98
      %s100 = sphi 0, %s98
      %s101 = sphi 0, %s100
      %s115 = sphi 0, %s101
      %s119 = sphi 0, %s119
      %s121 = sphi 0, %s119
      %s122 = sphi 0, %s121
      %s136 = sphi 0, %s122
      %s140 = sphi 0, %s140
      %s142 = sphi 0, %s140
      %s143 = sphi 0, %s142
      %s157 = sphi 0, %s143
      %s161 = sphi 0, %s161
      %s163 = sphi 0, %s161
      %s164 = sphi 0, %s163
      %s178 = sphi 0, %s164
      %s184 = sphi 0, %s186
      %s187 = sphi 0, %s184
      %s188 = sphi 0, %s187
      %s204 = sphi 0, %s188
    $region4: #{tpu_custom_call.1} parent=1 // loop_header_branch
      %25 = sbr.rel (%p23) target = $region8
    $region5: #{tpu_custom_call.1} parent=1 // loop_body
      %s27 = ssub.s32 %s22, 1
      %s28 = ssub.s32 %s22, 2
      %s29 = sadd.s32 %s22, 1
      %s30 = ssub.s32 %s22, %s29
      %p31 = scmp.eq.s32.totalorder %s30, 0
      %s33 = sadd.s32 %s32, 1
      %s34 = scalar_select %p31, %s32, %s33
      %p37 = pneg %p31
      %p38 = scmp.eq.s32.totalorder %s22, 1
      %p39 = por %p37, %p38
      %p40 = scmp.ne.s32.totalorder %s32, %s35
      %p41 = scmp.eq.s32.totalorder %s22, 0
      %p42 = por %p40, %p41
      %p43 = scmp.ne.s32.totalorder %s32, %s35
      %p44 = scmp.eq.s32.totalorder %s27, 1
      %p45 = por %p43, %p44
      %p46 = scmp.ne.s32.totalorder %s35, %s36
      %p47 = scmp.eq.s32.totalorder %s27, 0
      %p48 = por %p46, %p47
      %p49 = scmp.ne.s32.totalorder %s35, %s36
      %p50 = scmp.eq.s32.totalorder %s28, 1
      %p51 = por %p49, %p50
      %p53 = scmp.ne.s32.totalorder %s36, %s52
      %p54 = scmp.eq.s32.totalorder %s28, 0
      %p55 = por %p53, %p54
      %s57 = sadd.s32 %s56, 1
      %p60 = scmp.eq.s32.totalorder %s22, 1
      %p61 = scmp.ne.s32.totalorder %s56, %s58
      %p62 = scmp.eq.s32.totalorder %s22, 0
      %p63 = por %p61, %p62
      %p64 = scmp.ne.s32.totalorder %s56, %s58
      %p65 = scmp.eq.s32.totalorder %s27, 1
      %p66 = por %p64, %p65
      %p67 = scmp.ne.s32.totalorder %s58, %s59
      %p68 = scmp.eq.s32.totalorder %s27, 0
      %p69 = por %p67, %p68
      %p70 = scmp.ne.s32.totalorder %s58, %s59
      %p71 = scmp.eq.s32.totalorder %s28, 1
      %p72 = por %p70, %p71
      %p74 = scmp.ne.s32.totalorder %s59, %s73
      %p75 = scmp.eq.s32.totalorder %s28, 0
      %p76 = por %p74, %p75
      %s78 = sadd.s32 %s77, 1
      %p81 = scmp.eq.s32.totalorder %s22, 1
      %p82 = scmp.ne.s32.totalorder %s77, %s79
      %p83 = scmp.eq.s32.totalorder %s22, 0
      %p84 = por %p82, %p83
      %p85 = scmp.ne.s32.totalorder %s77, %s79
      %p86 = scmp.eq.s32.totalorder %s27, 1
      %p87 = por %p85, %p86
      %p88 = scmp.ne.s32.totalorder %s79, %s80
      %p89 = scmp.eq.s32.totalorder %s27, 0
      %p90 = por %p88, %p89
      %p91 = scmp.ne.s32.totalorder %s79, %s80
      %p92 = scmp.eq.s32.totalorder %s28, 1
      %p93 = por %p91, %p92
      %p95 = scmp.ne.s32.totalorder %s80, %s94
      %p96 = scmp.eq.s32.totalorder %s28, 0
      %p97 = por %p95, %p96
      %s99 = sadd.s32 %s98, 1
      %p102 = scmp.eq.s32.totalorder %s22, 1
      %p103 = scmp.ne.s32.totalorder %s98, %s100
      %p104 = scmp.eq.s32.totalorder %s22, 0
      %p105 = por %p103, %p104
      %p106 = scmp.ne.s32.totalorder %s98, %s100
      %p107 = scmp.eq.s32.totalorder %s27, 1
      %p108 = por %p106, %p107
      %p109 = scmp.ne.s32.totalorder %s100, %s101
      %p110 = scmp.eq.s32.totalorder %s27, 0
      %p111 = por %p109, %p110
      %p112 = scmp.ne.s32.totalorder %s100, %s101
      %p113 = scmp.eq.s32.totalorder %s28, 1
      %p114 = por %p112, %p113
      %p116 = scmp.ne.s32.totalorder %s101, %s115
      %p117 = scmp.eq.s32.totalorder %s28, 0
      %p118 = por %p116, %p117
      %s120 = sadd.s32 %s119, 1
      %p123 = scmp.eq.s32.totalorder %s22, 1
      %p124 = scmp.ne.s32.totalorder %s119, %s121
      %p125 = scmp.eq.s32.totalorder %s22, 0
      %p126 = por %p124, %p125
      %p127 = scmp.ne.s32.totalorder %s119, %s121
      %p128 = scmp.eq.s32.totalorder %s27, 1
      %p129 = por %p127, %p128
      %p130 = scmp.ne.s32.totalorder %s121, %s122
      %p131 = scmp.eq.s32.totalorder %s27, 0
      %p132 = por %p130, %p131
      %p133 = scmp.ne.s32.totalorder %s121, %s122
      %p134 = scmp.eq.s32.totalorder %s28, 1
      %p135 = por %p133, %p134
      %p137 = scmp.ne.s32.totalorder %s122, %s136
      %p138 = scmp.eq.s32.totalorder %s28, 0
      %p139 = por %p137, %p138
      %s141 = sadd.s32 %s140, 1
      %p144 = scmp.eq.s32.totalorder %s22, 1
      %p145 = scmp.ne.s32.totalorder %s140, %s142
      %p146 = scmp.eq.s32.totalorder %s22, 0
      %p147 = por %p145, %p146
      %p148 = scmp.ne.s32.totalorder %s140, %s142
      %p149 = scmp.eq.s32.totalorder %s27, 1
      %p150 = por %p148, %p149
      %p151 = scmp.ne.s32.totalorder %s142, %s143
      %p152 = scmp.eq.s32.totalorder %s27, 0
      %p153 = por %p151, %p152
      %p154 = scmp.ne.s32.totalorder %s142, %s143
      %p155 = scmp.eq.s32.totalorder %s28, 1
      %p156 = por %p154, %p155
      %p158 = scmp.ne.s32.totalorder %s143, %s157
      %p159 = scmp.eq.s32.totalorder %s28, 0
      %p160 = por %p158, %p159
      %s162 = sadd.s32 %s161, 1
      %p165 = scmp.eq.s32.totalorder %s22, 1
      %p166 = scmp.ne.s32.totalorder %s161, %s163
      %p167 = scmp.eq.s32.totalorder %s22, 0
      %p168 = por %p166, %p167
      %p169 = scmp.ne.s32.totalorder %s161, %s163
      %p170 = scmp.eq.s32.totalorder %s27, 1
      %p171 = por %p169, %p170
      %p172 = scmp.ne.s32.totalorder %s163, %s164
      %p173 = scmp.eq.s32.totalorder %s27, 0
      %p174 = por %p172, %p173
      %p175 = scmp.ne.s32.totalorder %s163, %s164
      %p176 = scmp.eq.s32.totalorder %s28, 1
      %p177 = por %p175, %p176
      %p179 = scmp.ne.s32.totalorder %s164, %s178
      %p180 = scmp.eq.s32.totalorder %s28, 0
      %p181 = por %p179, %p180
      %s182 = ssub.s32 %s22, %s29
      %p183 = scmp.eq.s32.totalorder %s182, 0
      %s185 = sadd.s32 %s184, 1
      %s186 = scalar_select %p183, %s184, %s185
      %p189 = pneg %p183
      %p190 = scmp.eq.s32.totalorder %s22, 1
      %p191 = por %p189, %p190
      %p192 = scmp.ne.s32.totalorder %s184, %s187
      %p193 = scmp.eq.s32.totalorder %s22, 0
      %p194 = por %p192, %p193
      %p195 = scmp.ne.s32.totalorder %s184, %s187
      %p196 = scmp.eq.s32.totalorder %s27, 1
      %p197 = por %p195, %p196
      %p198 = scmp.ne.s32.totalorder %s187, %s188
      %p199 = scmp.eq.s32.totalorder %s27, 0
      %p200 = por %p198, %p199
      %p201 = scmp.ne.s32.totalorder %s187, %s188
      %p202 = scmp.eq.s32.totalorder %s28, 1
      %p203 = por %p201, %p202
      %p205 = scmp.ne.s32.totalorder %s188, %s204
      %p206 = scmp.eq.s32.totalorder %s28, 0
      %p207 = por %p205, %p206
      %p208 = scmp.le.s32.totalorder 1, %s22
      %p209 = scmp.lt.s32.totalorder %s22, 3
      %p210 = pnand %p208, %p209
      %p211 = pneg %p210
      // Predicated region
      $region9: #{tpu_custom_call.1} parent=5 // pred_check
        _
      $region10: #{tpu_custom_call.1} parent=5 // pred_check_branch
        %213 = sbr.rel (%p210) target = $region12
      $region11: #{tpu_custom_call.1} parent=5 // pred_region
        %s214 = ssub.s32 %s22, 1
        // Predicated region
        $region13: #{tpu_custom_call.1} parent=11 // pred_check
          %p215 = pneg %p69
        $region14: #{tpu_custom_call.1} parent=11 // pred_check_branch
          %217 = sbr.rel (%p215) target = $region16
        $region15: #{tpu_custom_call.1} parent=11 // pred_region
          %s219 = ssub.s32 128, 128
          %220 = vsyncadd [#allocation7], %s219
          %s221 = sshll.u32 [#allocation6], 4
          %s222 = int_to_ptr.vmem [resolvable:$true] %s221
          %227 = dma.hbm_to_vmem [thread:$0]  %s1, 128, %s222, [#allocation7], 64, 64, 4
        $region16: #{tpu_custom_call.1} parent=11 // pred_fallthru
          _
        // Predicated region
        $region17: #{tpu_custom_call.1} parent=11 // pred_check
          %p228 = pneg %p90
        $region18: #{tpu_custom_call.1} parent=11 // pred_check_branch
          %230 = sbr.rel (%p228) target = $region20
        $region19: #{tpu_custom_call.1} parent=11 // pred_region
          %s232 = ssub.s32 16, 16
          %233 = vsyncadd [#allocation7], %s232
          %s235 = sshll.u32 [#allocation8], 4
          %s236 = int_to_ptr.vmem [resolvable:$true] %s235
          %238 = dma.hbm_to_vmem [thread:$0]  %s2, 16, %s236, [#allocation7]
        $region20: #{tpu_custom_call.1} parent=11 // pred_fallthru
          _
        // Predicated region
        $region21: #{tpu_custom_call.1} parent=11 // pred_check
          %p239 = pneg %p111
        $region22: #{tpu_custom_call.1} parent=11 // pred_check_branch
          %241 = sbr.rel (%p239) target = $region24
        $region23: #{tpu_custom_call.1} parent=11 // pred_region
          %s243 = ssub.s32 16, 16
          %244 = vsyncadd [#allocation10], %s243
          %s246 = sshll.u32 [#allocation9], 4
          %s247 = int_to_ptr.vmem [resolvable:$true] %s246
          %249 = dma.hbm_to_vmem [thread:$0]  %s3, 16, %s247, [#allocation10]
        $region24: #{tpu_custom_call.1} parent=11 // pred_fallthru
          _
        // Predicated region
        $region25: #{tpu_custom_call.1} parent=11 // pred_check
          %p250 = pneg %p132
        $region26: #{tpu_custom_call.1} parent=11 // pred_check_branch
          %252 = sbr.rel (%p250) target = $region28
        $region27: #{tpu_custom_call.1} parent=11 // pred_region
          %s254 = ssub.s32 128, 128
          %255 = vsyncadd [#allocation10], %s254
          %s256 = sshll.u32 [#allocation11], 4
          %s257 = int_to_ptr.vmem [resolvable:$true] %s256
          %262 = dma.hbm_to_vmem [thread:$0]  %s4, 128, %s257, [#allocation10], 64, 64, 4
        $region28: #{tpu_custom_call.1} parent=11 // pred_fallthru
          _
        // Predicated region
        $region29: #{tpu_custom_call.1} parent=11 // pred_check
          %p263 = pneg %p153
        $region30: #{tpu_custom_call.1} parent=11 // pred_check_branch
          %265 = sbr.rel (%p263) target = $region32
        $region31: #{tpu_custom_call.1} parent=11 // pred_region
          %s267 = ssub.s32 16, 16
          %268 = vsyncadd [#allocation13], %s267
          %s270 = sshll.u32 [#allocation12], 4
          %s271 = int_to_ptr.vmem [resolvable:$true] %s270
          %273 = dma.hbm_to_vmem [thread:$0]  %s5, 16, %s271, [#allocation13]
        $region32: #{tpu_custom_call.1} parent=11 // pred_fallthru
          _
        // Predicated region
        $region33: #{tpu_custom_call.1} parent=11 // pred_check
          %p274 = pneg %p174
        $region34: #{tpu_custom_call.1} parent=11 // pred_check_branch
          %276 = sbr.rel (%p274) target = $region36
        $region35: #{tpu_custom_call.1} parent=11 // pred_region
          %s278 = ssub.s32 16, 16
          %279 = vsyncadd [#allocation13], %s278
          %s281 = sshll.u32 [#allocation14], 4
          %s282 = int_to_ptr.vmem [resolvable:$true] %s281
          %284 = dma.hbm_to_vmem [thread:$0]  %s6, 16, %s282, [#allocation13]
        $region36: #{tpu_custom_call.1} parent=11 // pred_fallthru
          _
      $region12: #{tpu_custom_call.1} parent=5 // pred_fallthru
        _
      %p285 = scmp.lt.s32.totalorder %s22, 2
      // Predicated region
      $region37: #{tpu_custom_call.1} parent=5 // pred_check
        %p286 = pneg %p285
      $region38: #{tpu_custom_call.1} parent=5 // pred_check_branch
        %288 = sbr.rel (%p286) target = $region40
      $region39: #{tpu_custom_call.1} parent=5 // pred_region
        // Predicated region
        $region41: #{tpu_custom_call.1} parent=39 // pred_check
          %p289 = pneg %p42
        $region42: #{tpu_custom_call.1} parent=39 // pred_check_branch
          %291 = sbr.rel (%p289) target = $region44
        $region43: #{tpu_custom_call.1} parent=39 // pred_region
          %s292 = sand.u32 %s32, 1
          %s293 = scalar_lea.sflag [#allocation4], %s292
          %s294 = sand.u32 %s32, 1
          %s295 = smul.addr %s294, 128
          %s296 = scalar_lea.vmem [#allocation3], %s295
          %s298 = ssub.s32 2048, 2048
          %299 = vsyncadd %s293, %s298
          %s300 = smul.addr %s22, 32
          %s301 = smul.addr %s300, 64
          %s302 = scalar_lea.hbm %s0, %s301
          %s303 = sshll.u32 %s296, 4
          %s304 = int_to_ptr.vmem [resolvable:$true] %s303
          %309 = dma.hbm_to_vmem [thread:$0]  %s302, 2048, %s304, %s293, 64, 64, 4
        $region44: #{tpu_custom_call.1} parent=39 // pred_fallthru
          _
      $region40: #{tpu_custom_call.1} parent=5 // pred_fallthru
        _
      %p310 = scmp.le.s32.totalorder 1, %s22
      %p311 = scmp.lt.s32.totalorder %s22, 3
      %p312 = pnand %p310, %p311
      %p313 = pneg %p312
      // Predicated region
      $region45: #{tpu_custom_call.1} parent=5 // pred_check
        _
      $region46: #{tpu_custom_call.1} parent=5 // pred_check_branch
        %315 = sbr.rel (%p312) target = $region48
      $region47: #{tpu_custom_call.1} parent=5 // pred_region
        %s316 = ssub.s32 %s22, 1
        %s317 = sand.u32 %s35, 1
        %s318 = scalar_lea.sflag [#allocation4], %s317
        %s319 = sand.u32 %s35, 1
        %s320 = smul.addr %s319, 128
        %s321 = scalar_lea.vmem [#allocation3], %s320
        // Predicated region
        $region49: #{tpu_custom_call.1} parent=47 // pred_check
          %p322 = pneg %p48
        $region50: #{tpu_custom_call.1} parent=47 // pred_check_branch
          %324 = sbr.rel (%p322) target = $region52
        $region51: #{tpu_custom_call.1} parent=47 // pred_region
          %325 = dma.done %s318, 2048
        $region52: #{tpu_custom_call.1} parent=47 // pred_fallthru
          _
        // Predicated region
        $region53: #{tpu_custom_call.1} parent=47 // pred_check
          %p326 = pneg %p69
        $region54: #{tpu_custom_call.1} parent=47 // pred_check_branch
          %328 = sbr.rel (%p326) target = $region56
        $region55: #{tpu_custom_call.1} parent=47 // pred_region
          %329 = dma.done [#allocation7], 128
        $region56: #{tpu_custom_call.1} parent=47 // pred_fallthru
          _
        // Predicated region
        $region57: #{tpu_custom_call.1} parent=47 // pred_check
          %p330 = pneg %p90
        $region58: #{tpu_custom_call.1} parent=47 // pred_check_branch
          %332 = sbr.rel (%p330) target = $region60
        $region59: #{tpu_custom_call.1} parent=47 // pred_region
          %333 = dma.done [#allocation7], 16
        $region60: #{tpu_custom_call.1} parent=47 // pred_fallthru
          _
        // Predicated region
        $region61: #{tpu_custom_call.1} parent=47 // pred_check
          %p334 = pneg %p111
        $region62: #{tpu_custom_call.1} parent=47 // pred_check_branch
          %336 = sbr.rel (%p334) target = $region64
        $region63: #{tpu_custom_call.1} parent=47 // pred_region
          %337 = dma.done [#allocation10], 16
        $region64: #{tpu_custom_call.1} parent=47 // pred_fallthru
          _
        // Predicated region
        $region65: #{tpu_custom_call.1} parent=47 // pred_check
          %p338 = pneg %p132
        $region66: #{tpu_custom_call.1} parent=47 // pred_check_branch
          %340 = sbr.rel (%p338) target = $region68
        $region67: #{tpu_custom_call.1} parent=47 // pred_region
          %341 = dma.done [#allocation10], 128
        $region68: #{tpu_custom_call.1} parent=47 // pred_fallthru
          _
        // Predicated region
        $region69: #{tpu_custom_call.1} parent=47 // pred_check
          %p342 = pneg %p153
        $region70: #{tpu_custom_call.1} parent=47 // pred_check_branch
          %344 = sbr.rel (%p342) target = $region72
        $region71: #{tpu_custom_call.1} parent=47 // pred_region
          %345 = dma.done [#allocation13], 16
        $region72: #{tpu_custom_call.1} parent=47 // pred_fallthru
          _
        // Predicated region
        $region73: #{tpu_custom_call.1} parent=47 // pred_check
          %p346 = pneg %p174
        $region74: #{tpu_custom_call.1} parent=47 // pred_check_branch
          %348 = sbr.rel (%p346) target = $region76
        $region75: #{tpu_custom_call.1} parent=47 // pred_region
          %349 = dma.done [#allocation13], 16
        $region76: #{tpu_custom_call.1} parent=47 // pred_fallthru
          _
        %s350 = sand.u32 %s35, 1
        %s351 = scalar_lea.sflag [#allocation4], %s350
        %s352 = sand.u32 %s35, 1
        %s353 = smul.addr %s352, 128
        %s354 = scalar_lea.vmem [#allocation3], %s353
        %p355 = pneg %p48
        %p356 = pneg %p45
        %p357 = pneg %p69
        %p358 = pneg %p66
        %p359 = pneg %p90
        %p360 = pneg %p87
        %p361 = pneg %p111
        %p362 = pneg %p108
        %p363 = pneg %p132
        %p364 = pneg %p129
        %p365 = pneg %p153
        %p366 = pneg %p150
        %p367 = pneg %p174
        %p368 = pneg %p171
        %p369 = pneg %p200
        %p370 = pneg %p197
        %s371 = sand.u32 %s187, 1
        %s372 = scalar_lea.sflag [#allocation5], %s371
        %s373 = sand.u32 %s187, 1
        %s374 = smul.addr %s373, 128
        %s375 = scalar_lea.vmem [#allocation15], %s374
        %vm377 = vcmask 97280
        %378 = vst.msk [vmem:[#allocation2] sm:$0xff] %vm377, 0
        %s379 = scalar_lea.vmem [#allocation2], 136
        %380 = vst.msk [vmem:[%s379] sm:$0xff] %vm377, 0
        %s381 = scalar_lea.vmem [#allocation2], 8
        %vm382 = vcmask 24576
        %vm383 = vsmask.f32 256
        %vm384 = vmand %vm382, %vm383
        %v385 = vld [vmem:[%s381] sm:$0x1]
        %v386 = vsel %vm384, 0, %v385
        %387 = vst [vmem:[%s381] sm:$0x1] %v386
        %v388 = vld [vmem:[%s381 + $0x8] sm:$0x1]
        %v389 = vsel %vm384, 0, %v388
        %390 = vst [vmem:[%s381 + $0x8] sm:$0x1] %v389
        %v391 = vld [vmem:[%s381 + $0x10] sm:$0x1]
        %v392 = vsel %vm384, 0, %v391
        %393 = vst [vmem:[%s381 + $0x10] sm:$0x1] %v392
        %v394 = vld [vmem:[%s381 + $0x18] sm:$0x1]
        %v395 = vsel %vm384, 0, %v394
        %396 = vst [vmem:[%s381 + $0x18] sm:$0x1] %v395
        %v397 = vld [vmem:[%s381 + $0x20] sm:$0x1]
        %v398 = vsel %vm384, 0, %v397
        %399 = vst [vmem:[%s381 + $0x20] sm:$0x1] %v398
        %v400 = vld [vmem:[%s381 + $0x28] sm:$0x1]
        %v401 = vsel %vm384, 0, %v400
        %402 = vst [vmem:[%s381 + $0x28] sm:$0x1] %v401
        %v403 = vld [vmem:[%s381 + $0x30] sm:$0x1]
        %v404 = vsel %vm384, 0, %v403
        %405 = vst [vmem:[%s381 + $0x30] sm:$0x1] %v404
        %v406 = vld [vmem:[%s381 + $0x38] sm:$0x1]
        %v407 = vsel %vm384, 0, %v406
        %408 = vst [vmem:[%s381 + $0x38] sm:$0x1] %v407
        %v409 = vld [vmem:[%s381 + $0x40] sm:$0x1]
        %v410 = vsel %vm384, 0, %v409
        %411 = vst [vmem:[%s381 + $0x40] sm:$0x1] %v410
        %v412 = vld [vmem:[%s381 + $0x48] sm:$0x1]
        %v413 = vsel %vm384, 0, %v412
        %414 = vst [vmem:[%s381 + $0x48] sm:$0x1] %v413
        %v415 = vld [vmem:[%s381 + $0x50] sm:$0x1]
        %v416 = vsel %vm384, 0, %v415
        %417 = vst [vmem:[%s381 + $0x50] sm:$0x1] %v416
        %v418 = vld [vmem:[%s381 + $0x58] sm:$0x1]
        %v419 = vsel %vm384, 0, %v418
        %420 = vst [vmem:[%s381 + $0x58] sm:$0x1] %v419
        %v421 = vld [vmem:[%s381 + $0x60] sm:$0x1]
        %v422 = vsel %vm384, 0, %v421
        %423 = vst [vmem:[%s381 + $0x60] sm:$0x1] %v422
        %v424 = vld [vmem:[%s381 + $0x68] sm:$0x1]
        %v425 = vsel %vm384, 0, %v424
        %426 = vst [vmem:[%s381 + $0x68] sm:$0x1] %v425
        %v427 = vld [vmem:[%s381 + $0x70] sm:$0x1]
        %v428 = vsel %vm384, 0, %v427
        %429 = vst [vmem:[%s381 + $0x70] sm:$0x1] %v428
        %v430 = vld [vmem:[%s381 + $0x78] sm:$0x1]
        %v431 = vsel %vm384, 0, %v430
        %432 = vst [vmem:[%s381 + $0x78] sm:$0x1] %v431
        %vm433 = vcmask 97351
        %vm434 = vsmask.f32 7966
        %vm435 = vmand %vm433, %vm434
        %v436 = vld [vmem:[%s381] sm:$0x80]
        %v437 = vsel %vm435, 0, %v436
        %438 = vst [vmem:[%s381] sm:$0x80] %v437
        %v439 = vld [vmem:[%s381 + $0x8] sm:$0x80]
        %v440 = vsel %vm435, 0, %v439
        %441 = vst [vmem:[%s381 + $0x8] sm:$0x80] %v440
        %v442 = vld [vmem:[%s381 + $0x10] sm:$0x80]
        %v443 = vsel %vm435, 0, %v442
        %444 = vst [vmem:[%s381 + $0x10] sm:$0x80] %v443
        %v445 = vld [vmem:[%s381 + $0x18] sm:$0x80]
        %v446 = vsel %vm435, 0, %v445
        %447 = vst [vmem:[%s381 + $0x18] sm:$0x80] %v446
        %v448 = vld [vmem:[%s381 + $0x20] sm:$0x80]
        %v449 = vsel %vm435, 0, %v448
        %450 = vst [vmem:[%s381 + $0x20] sm:$0x80] %v449
        %v451 = vld [vmem:[%s381 + $0x28] sm:$0x80]
        %v452 = vsel %vm435, 0, %v451
        %453 = vst [vmem:[%s381 + $0x28] sm:$0x80] %v452
        %v454 = vld [vmem:[%s381 + $0x30] sm:$0x80]
        %v455 = vsel %vm435, 0, %v454
        %456 = vst [vmem:[%s381 + $0x30] sm:$0x80] %v455
        %v457 = vld [vmem:[%s381 + $0x38] sm:$0x80]
        %v458 = vsel %vm435, 0, %v457
        %459 = vst [vmem:[%s381 + $0x38] sm:$0x80] %v458
        %v460 = vld [vmem:[%s381 + $0x40] sm:$0x80]
        %v461 = vsel %vm435, 0, %v460
        %462 = vst [vmem:[%s381 + $0x40] sm:$0x80] %v461
        %v463 = vld [vmem:[%s381 + $0x48] sm:$0x80]
        %v464 = vsel %vm435, 0, %v463
        %465 = vst [vmem:[%s381 + $0x48] sm:$0x80] %v464
        %v466 = vld [vmem:[%s381 + $0x50] sm:$0x80]
        %v467 = vsel %vm435, 0, %v466
        %468 = vst [vmem:[%s381 + $0x50] sm:$0x80] %v467
        %v469 = vld [vmem:[%s381 + $0x58] sm:$0x80]
        %v470 = vsel %vm435, 0, %v469
        %471 = vst [vmem:[%s381 + $0x58] sm:$0x80] %v470
        %v472 = vld [vmem:[%s381 + $0x60] sm:$0x80]
        %v473 = vsel %vm435, 0, %v472
        %474 = vst [vmem:[%s381 + $0x60] sm:$0x80] %v473
        %v475 = vld [vmem:[%s381 + $0x68] sm:$0x80]
        %v476 = vsel %vm435, 0, %v475
        %477 = vst [vmem:[%s381 + $0x68] sm:$0x80] %v476
        %v478 = vld [vmem:[%s381 + $0x70] sm:$0x80]
        %v479 = vsel %vm435, 0, %v478
        %480 = vst [vmem:[%s381 + $0x70] sm:$0x80] %v479
        %v481 = vld [vmem:[%s381 + $0x78] sm:$0x80]
        %v482 = vsel %vm435, 0, %v481
        %483 = vst [vmem:[%s381 + $0x78] sm:$0x80] %v482
        %v484 = vld [vmem:[%s321] sm:$0xf]
        %v485 = vld [vmem:[%s321 + $0x4] sm:$0xf]
        %v486 = vld [vmem:[%s321 + $0x8] sm:$0xf]
        %v487 = vld [vmem:[%s321 + $0xc] sm:$0xf]
        %v488 = vld [vmem:[%s321 + $0x10] sm:$0xf]
        %v489 = vld [vmem:[%s321 + $0x14] sm:$0xf]
        %v490 = vld [vmem:[%s321 + $0x18] sm:$0xf]
        %v491 = vld [vmem:[%s321 + $0x1c] sm:$0xf]
        %v492 = vld [vmem:[%s321 + $0x20] sm:$0xf]
        %v493 = vld [vmem:[%s321 + $0x24] sm:$0xf]
        %v494 = vld [vmem:[%s321 + $0x28] sm:$0xf]
        %v495 = vld [vmem:[%s321 + $0x2c] sm:$0xf]
        %v496 = vld [vmem:[%s321 + $0x30] sm:$0xf]
        %v497 = vld [vmem:[%s321 + $0x34] sm:$0xf]
        %v498 = vld [vmem:[%s321 + $0x38] sm:$0xf]
        %v499 = vld [vmem:[%s321 + $0x3c] sm:$0xf]
        %v500 = vld [vmem:[%s321 + $0x40] sm:$0xf]
        %v501 = vld [vmem:[%s321 + $0x44] sm:$0xf]
        %v502 = vld [vmem:[%s321 + $0x48] sm:$0xf]
        %v503 = vld [vmem:[%s321 + $0x4c] sm:$0xf]
        %v504 = vld [vmem:[%s321 + $0x50] sm:$0xf]
        %v505 = vld [vmem:[%s321 + $0x54] sm:$0xf]
        %v506 = vld [vmem:[%s321 + $0x58] sm:$0xf]
        %v507 = vld [vmem:[%s321 + $0x5c] sm:$0xf]
        %v508 = vld [vmem:[%s321 + $0x60] sm:$0xf]
        %v509 = vld [vmem:[%s321 + $0x64] sm:$0xf]
        %v510 = vld [vmem:[%s321 + $0x68] sm:$0xf]
        %v511 = vld [vmem:[%s321 + $0x6c] sm:$0xf]
        %v512 = vld [vmem:[%s321 + $0x70] sm:$0xf]
        %v513 = vld [vmem:[%s321 + $0x74] sm:$0xf]
        %v514 = vld [vmem:[%s321 + $0x78] sm:$0xf]
        %v515 = vld [vmem:[%s321 + $0x7c] sm:$0xf]
        %v548 = vunpack.c.l.b16 %v484
        %v549 = vunpack.c.l.b16 %v485
        %v550 = vunpack.c.l.b16 %v486
        %v551 = vunpack.c.l.b16 %v487
        %v552 = vunpack.c.l.b16 %v488
        %v553 = vunpack.c.l.b16 %v489
        %v554 = vunpack.c.l.b16 %v490
        %v555 = vunpack.c.l.b16 %v491
        %v556 = vunpack.c.l.b16 %v492
        %v557 = vunpack.c.l.b16 %v493
        %v558 = vunpack.c.l.b16 %v494
        %v559 = vunpack.c.l.b16 %v495
        %v560 = vunpack.c.l.b16 %v496
        %v561 = vunpack.c.l.b16 %v497
        %v562 = vunpack.c.l.b16 %v498
        %v563 = vunpack.c.l.b16 %v499
        %v564 = vunpack.c.l.b16 %v500
        %v565 = vunpack.c.l.b16 %v501
        %v566 = vunpack.c.l.b16 %v502
        %v567 = vunpack.c.l.b16 %v503
        %v568 = vunpack.c.l.b16 %v504
        %v569 = vunpack.c.l.b16 %v505
        %v570 = vunpack.c.l.b16 %v506
        %v571 = vunpack.c.l.b16 %v507
        %v572 = vunpack.c.l.b16 %v508
        %v573 = vunpack.c.l.b16 %v509
        %v574 = vunpack.c.l.b16 %v510
        %v575 = vunpack.c.l.b16 %v511
        %v576 = vunpack.c.l.b16 %v512
        %v577 = vunpack.c.l.b16 %v513
        %v578 = vunpack.c.l.b16 %v514
        %v579 = vunpack.c.l.b16 %v515
        %v580 = vpack.c.b16 %v549, %v548
        %v581 = vpack.c.b16 %v551, %v550
        %v582 = vpack.c.b16 %v553, %v552
        %v583 = vpack.c.b16 %v555, %v554
        %v584 = vpack.c.b16 %v557, %v556
        %v585 = vpack.c.b16 %v559, %v558
        %v586 = vpack.c.b16 %v561, %v560
        %v587 = vpack.c.b16 %v563, %v562
        %v588 = vpack.c.b16 %v565, %v564
        %v589 = vpack.c.b16 %v567, %v566
        %v590 = vpack.c.b16 %v569, %v568
        %v591 = vpack.c.b16 %v571, %v570
        %v592 = vpack.c.b16 %v573, %v572
        %v593 = vpack.c.b16 %v575, %v574
        %v594 = vpack.c.b16 %v577, %v576
        %v595 = vpack.c.b16 %v579, %v578
        %v597 = vshrl.u32 %v580, 16
        %v599 = vrot.slane %v597, 7
        %v600 = vshll.u32 %v580, 16
        %v602 = vor.u32 %v599, %v600
        %v604 = vshrl.u32 %v581, 16
        %v606 = vrot.slane %v604, 7
        %v607 = vshll.u32 %v581, 16
        %v609 = vor.u32 %v606, %v607
        %v611 = vshrl.u32 %v582, 16
        %v613 = vrot.slane %v611, 7
        %v614 = vshll.u32 %v582, 16
        %v616 = vor.u32 %v613, %v614
        %v618 = vshrl.u32 %v583, 16
        %v620 = vrot.slane %v618, 7
        %v621 = vshll.u32 %v583, 16
        %v623 = vor.u32 %v620, %v621
        %v625 = vshrl.u32 %v584, 16
        %v627 = vrot.slane %v625, 7
        %v628 = vshll.u32 %v584, 16
        %v630 = vor.u32 %v627, %v628
        %v632 = vshrl.u32 %v585, 16
        %v634 = vrot.slane %v632, 7
        %v635 = vshll.u32 %v585, 16
        %v637 = vor.u32 %v634, %v635
        %v639 = vshrl.u32 %v586, 16
        %v641 = vrot.slane %v639, 7
        %v642 = vshll.u32 %v586, 16
        %v644 = vor.u32 %v641, %v642
        %v646 = vshrl.u32 %v587, 16
        %v648 = vrot.slane %v646, 7
        %v649 = vshll.u32 %v587, 16
        %v651 = vor.u32 %v648, %v649
        %v653 = vshrl.u32 %v588, 16
        %v655 = vrot.slane %v653, 7
        %v656 = vshll.u32 %v588, 16
        %v658 = vor.u32 %v655, %v656
        %v660 = vshrl.u32 %v589, 16
        %v662 = vrot.slane %v660, 7
        %v663 = vshll.u32 %v589, 16
        %v665 = vor.u32 %v662, %v663
        %v667 = vshrl.u32 %v590, 16
        %v669 = vrot.slane %v667, 7
        %v670 = vshll.u32 %v590, 16
        %v672 = vor.u32 %v669, %v670
        %v674 = vshrl.u32 %v591, 16
        %v676 = vrot.slane %v674, 7
        %v677 = vshll.u32 %v591, 16
        %v679 = vor.u32 %v676, %v677
        %v681 = vshrl.u32 %v592, 16
        %v683 = vrot.slane %v681, 7
        %v684 = vshll.u32 %v592, 16
        %v686 = vor.u32 %v683, %v684
        %v688 = vshrl.u32 %v593, 16
        %v690 = vrot.slane %v688, 7
        %v691 = vshll.u32 %v593, 16
        %v693 = vor.u32 %v690, %v691
        %v695 = vshrl.u32 %v594, 16
        %v697 = vrot.slane %v695, 7
        %v698 = vshll.u32 %v594, 16
        %v700 = vor.u32 %v697, %v698
        %v702 = vshrl.u32 %v595, 16
        %v704 = vrot.slane %v702, 7
        %v705 = vshll.u32 %v595, 16
        %v707 = vor.u32 %v704, %v705
        %vm724 = vcmask 31744
        %vm725 = vsmask.f32 7938
        %vm726 = vmand %vm724, %vm725
        %v727 = vld [vmem:[%s381] sm:$0xff]
        %v728 = vsel %vm726, %v602, %v727
        %729 = vst [vmem:[%s381] sm:$0xff] %v728
        %v730 = vld [vmem:[%s381 + $0x8] sm:$0xff]
        %v731 = vsel %vm726, %v609, %v730
        %732 = vst [vmem:[%s381 + $0x8] sm:$0xff] %v731
        %v733 = vld [vmem:[%s381 + $0x10] sm:$0xff]
        %v734 = vsel %vm726, %v616, %v733
        %735 = vst [vmem:[%s381 + $0x10] sm:$0xff] %v734
        %v736 = vld [vmem:[%s381 + $0x18] sm:$0xff]
        %v737 = vsel %vm726, %v623, %v736
        %738 = vst [vmem:[%s381 + $0x18] sm:$0xff] %v737
        %v739 = vld [vmem:[%s381 + $0x20] sm:$0xff]
        %v740 = vsel %vm726, %v630, %v739
        %741 = vst [vmem:[%s381 + $0x20] sm:$0xff] %v740
        %v742 = vld [vmem:[%s381 + $0x28] sm:$0xff]
        %v743 = vsel %vm726, %v637, %v742
        %744 = vst [vmem:[%s381 + $0x28] sm:$0xff] %v743
        %v745 = vld [vmem:[%s381 + $0x30] sm:$0xff]
        %v746 = vsel %vm726, %v644, %v745
        %747 = vst [vmem:[%s381 + $0x30] sm:$0xff] %v746
        %v748 = vld [vmem:[%s381 + $0x38] sm:$0xff]
        %v749 = vsel %vm726, %v651, %v748
        %750 = vst [vmem:[%s381 + $0x38] sm:$0xff] %v749
        %v751 = vld [vmem:[%s381 + $0x40] sm:$0xff]
        %v752 = vsel %vm726, %v658, %v751
        %753 = vst [vmem:[%s381 + $0x40] sm:$0xff] %v752
        %v754 = vld [vmem:[%s381 + $0x48] sm:$0xff]
        %v755 = vsel %vm726, %v665, %v754
        %756 = vst [vmem:[%s381 + $0x48] sm:$0xff] %v755
        %v757 = vld [vmem:[%s381 + $0x50] sm:$0xff]
        %v758 = vsel %vm726, %v672, %v757
        %759 = vst [vmem:[%s381 + $0x50] sm:$0xff] %v758
        %v760 = vld [vmem:[%s381 + $0x58] sm:$0xff]
        %v761 = vsel %vm726, %v679, %v760
        %762 = vst [vmem:[%s381 + $0x58] sm:$0xff] %v761
        %v763 = vld [vmem:[%s381 + $0x60] sm:$0xff]
        %v764 = vsel %vm726, %v686, %v763
        %765 = vst [vmem:[%s381 + $0x60] sm:$0xff] %v764
        %v766 = vld [vmem:[%s381 + $0x68] sm:$0xff]
        %v767 = vsel %vm726, %v693, %v766
        %768 = vst [vmem:[%s381 + $0x68] sm:$0xff] %v767
        %v769 = vld [vmem:[%s381 + $0x70] sm:$0xff]
        %v770 = vsel %vm726, %v700, %v769
        %771 = vst [vmem:[%s381 + $0x70] sm:$0xff] %v770
        %v772 = vld [vmem:[%s381 + $0x78] sm:$0xff]
        %v773 = vsel %vm726, %v707, %v772
        %774 = vst [vmem:[%s381 + $0x78] sm:$0xff] %v773
        %775 = vrot.lane.b32.xlu0 %v580, 4
        %v776 = vpop.permute.xlu0 %775
        %777 = vrot.lane.b32.xlu0 %v581, 4
        %v778 = vpop.permute.xlu0 %777
        %779 = vrot.lane.b32.xlu0 %v582, 4
        %v780 = vpop.permute.xlu0 %779
        %781 = vrot.lane.b32.xlu0 %v583, 4
        %v782 = vpop.permute.xlu0 %781
        %783 = vrot.lane.b32.xlu0 %v584, 4
        %v784 = vpop.permute.xlu0 %783
        %785 = vrot.lane.b32.xlu0 %v585, 4
        %v786 = vpop.permute.xlu0 %785
        %787 = vrot.lane.b32.xlu0 %v586, 4
        %v788 = vpop.permute.xlu0 %787
        %789 = vrot.lane.b32.xlu0 %v587, 4
        %v790 = vpop.permute.xlu0 %789
        %791 = vrot.lane.b32.xlu0 %v588, 4
        %v792 = vpop.permute.xlu0 %791
        %793 = vrot.lane.b32.xlu0 %v589, 4
        %v794 = vpop.permute.xlu0 %793
        %795 = vrot.lane.b32.xlu0 %v590, 4
        %v796 = vpop.permute.xlu0 %795
        %797 = vrot.lane.b32.xlu0 %v591, 4
        %v798 = vpop.permute.xlu0 %797
        %799 = vrot.lane.b32.xlu0 %v592, 4
        %v800 = vpop.permute.xlu0 %799
        %801 = vrot.lane.b32.xlu0 %v593, 4
        %v802 = vpop.permute.xlu0 %801
        %803 = vrot.lane.b32.xlu0 %v594, 4
        %v804 = vpop.permute.xlu0 %803
        %805 = vrot.lane.b32.xlu0 %v595, 4
        %v806 = vpop.permute.xlu0 %805
        %vm823 = vcmask 64544
        %824 = vst.msk [vmem:[%s381] sm:$0xff] %vm823, %v776
        %825 = vst.msk [vmem:[%s381 + $0x8] sm:$0xff] %vm823, %v778
        %826 = vst.msk [vmem:[%s381 + $0x10] sm:$0xff] %vm823, %v780
        %827 = vst.msk [vmem:[%s381 + $0x18] sm:$0xff] %vm823, %v782
        %828 = vst.msk [vmem:[%s381 + $0x20] sm:$0xff] %vm823, %v784
        %829 = vst.msk [vmem:[%s381 + $0x28] sm:$0xff] %vm823, %v786
        %830 = vst.msk [vmem:[%s381 + $0x30] sm:$0xff] %vm823, %v788
        %831 = vst.msk [vmem:[%s381 + $0x38] sm:$0xff] %vm823, %v790
        %832 = vst.msk [vmem:[%s381 + $0x40] sm:$0xff] %vm823, %v792
        %833 = vst.msk [vmem:[%s381 + $0x48] sm:$0xff] %vm823, %v794
        %834 = vst.msk [vmem:[%s381 + $0x50] sm:$0xff] %vm823, %v796
        %835 = vst.msk [vmem:[%s381 + $0x58] sm:$0xff] %vm823, %v798
        %836 = vst.msk [vmem:[%s381 + $0x60] sm:$0xff] %vm823, %v800
        %837 = vst.msk [vmem:[%s381 + $0x68] sm:$0xff] %vm823, %v802
        %838 = vst.msk [vmem:[%s381 + $0x70] sm:$0xff] %vm823, %v804
        %839 = vst.msk [vmem:[%s381 + $0x78] sm:$0xff] %vm823, %v806
        %v840 = vrot.slane %v600, 1
        %v841 = vor.u32 %v597, %v840
        %v842 = vrot.slane %v607, 1
        %v843 = vor.u32 %v604, %v842
        %v844 = vrot.slane %v614, 1
        %v845 = vor.u32 %v611, %v844
        %v846 = vrot.slane %v621, 1
        %v847 = vor.u32 %v618, %v846
        %v848 = vrot.slane %v628, 1
        %v849 = vor.u32 %v625, %v848
        %v850 = vrot.slane %v635, 1
        %v851 = vor.u32 %v632, %v850
        %v852 = vrot.slane %v642, 1
        %v853 = vor.u32 %v639, %v852
        %v854 = vrot.slane %v649, 1
        %v855 = vor.u32 %v646, %v854
        %v856 = vrot.slane %v656, 1
        %v857 = vor.u32 %v653, %v856
        %v858 = vrot.slane %v663, 1
        %v859 = vor.u32 %v660, %v858
        %v860 = vrot.slane %v670, 1
        %v861 = vor.u32 %v667, %v860
        %v862 = vrot.slane %v677, 1
        %v863 = vor.u32 %v674, %v862
        %v864 = vrot.slane %v684, 1
        %v865 = vor.u32 %v681, %v864
        %v866 = vrot.slane %v691, 1
        %v867 = vor.u32 %v688, %v866
        %v868 = vrot.slane %v698, 1
        %v869 = vor.u32 %v695, %v868
        %v870 = vrot.slane %v705, 1
        %v871 = vor.u32 %v702, %v870
        %872 = vrot.lane.b32.xlu0 %v841, 8
        %v873 = vpop.permute.xlu0 %872
        %874 = vrot.lane.b32.xlu0 %v843, 8
        %v875 = vpop.permute.xlu0 %874
        %876 = vrot.lane.b32.xlu0 %v845, 8
        %v877 = vpop.permute.xlu0 %876
        %878 = vrot.lane.b32.xlu0 %v847, 8
        %v879 = vpop.permute.xlu0 %878
        %880 = vrot.lane.b32.xlu0 %v849, 8
        %v881 = vpop.permute.xlu0 %880
        %882 = vrot.lane.b32.xlu0 %v851, 8
        %v883 = vpop.permute.xlu0 %882
        %884 = vrot.lane.b32.xlu0 %v853, 8
        %v885 = vpop.permute.xlu0 %884
        %886 = vrot.lane.b32.xlu0 %v855, 8
        %v887 = vpop.permute.xlu0 %886
        %888 = vrot.lane.b32.xlu0 %v857, 8
        %v889 = vpop.permute.xlu0 %888
        %890 = vrot.lane.b32.xlu0 %v859, 8
        %v891 = vpop.permute.xlu0 %890
        %892 = vrot.lane.b32.xlu0 %v861, 8
        %v893 = vpop.permute.xlu0 %892
        %894 = vrot.lane.b32.xlu0 %v863, 8
        %v895 = vpop.permute.xlu0 %894
        %896 = vrot.lane.b32.xlu0 %v865, 8
        %v897 = vpop.permute.xlu0 %896
        %898 = vrot.lane.b32.xlu0 %v867, 8
        %v899 = vpop.permute.xlu0 %898
        %900 = vrot.lane.b32.xlu0 %v869, 8
        %v901 = vpop.permute.xlu0 %900
        %902 = vrot.lane.b32.xlu0 %v871, 8
        %v903 = vpop.permute.xlu0 %902
        %vm920 = vcmask 97344
        %vm921 = vsmask.f32 7424
        %vm922 = vmand %vm920, %vm921
        %v923 = vld [vmem:[%s381] sm:$0xff]
        %v924 = vsel %vm922, %v873, %v923
        %925 = vst [vmem:[%s381] sm:$0xff] %v924
        %v926 = vld [vmem:[%s381 + $0x8] sm:$0xff]
        %v927 = vsel %vm922, %v875, %v926
        %928 = vst [vmem:[%s381 + $0x8] sm:$0xff] %v927
        %v929 = vld [vmem:[%s381 + $0x10] sm:$0xff]
        %v930 = vsel %vm922, %v877, %v929
        %931 = vst [vmem:[%s381 + $0x10] sm:$0xff] %v930
        %v932 = vld [vmem:[%s381 + $0x18] sm:$0xff]
        %v933 = vsel %vm922, %v879, %v932
        %934 = vst [vmem:[%s381 + $0x18] sm:$0xff] %v933
        %v935 = vld [vmem:[%s381 + $0x20] sm:$0xff]
        %v936 = vsel %vm922, %v881, %v935
        %937 = vst [vmem:[%s381 + $0x20] sm:$0xff] %v936
        %v938 = vld [vmem:[%s381 + $0x28] sm:$0xff]
        %v939 = vsel %vm922, %v883, %v938
        %940 = vst [vmem:[%s381 + $0x28] sm:$0xff] %v939
        %v941 = vld [vmem:[%s381 + $0x30] sm:$0xff]
        %v942 = vsel %vm922, %v885, %v941
        %943 = vst [vmem:[%s381 + $0x30] sm:$0xff] %v942
        %v944 = vld [vmem:[%s381 + $0x38] sm:$0xff]
        %v945 = vsel %vm922, %v887, %v944
        %946 = vst [vmem:[%s381 + $0x38] sm:$0xff] %v945
        %v947 = vld [vmem:[%s381 + $0x40] sm:$0xff]
        %v948 = vsel %vm922, %v889, %v947
        %949 = vst [vmem:[%s381 + $0x40] sm:$0xff] %v948
        %v950 = vld [vmem:[%s381 + $0x48] sm:$0xff]
        %v951 = vsel %vm922, %v891, %v950
        %952 = vst [vmem:[%s381 + $0x48] sm:$0xff] %v951
        %v953 = vld [vmem:[%s381 + $0x50] sm:$0xff]
        %v954 = vsel %vm922, %v893, %v953
        %955 = vst [vmem:[%s381 + $0x50] sm:$0xff] %v954
        %v956 = vld [vmem:[%s381 + $0x58] sm:$0xff]
        %v957 = vsel %vm922, %v895, %v956
        %958 = vst [vmem:[%s381 + $0x58] sm:$0xff] %v957
        %v959 = vld [vmem:[%s381 + $0x60] sm:$0xff]
        %v960 = vsel %vm922, %v897, %v959
        %961 = vst [vmem:[%s381 + $0x60] sm:$0xff] %v960
        %v962 = vld [vmem:[%s381 + $0x68] sm:$0xff]
        %v963 = vsel %vm922, %v899, %v962
        %964 = vst [vmem:[%s381 + $0x68] sm:$0xff] %v963
        %v965 = vld [vmem:[%s381 + $0x70] sm:$0xff]
        %v966 = vsel %vm922, %v901, %v965
        %967 = vst [vmem:[%s381 + $0x70] sm:$0xff] %v966
        %v968 = vld [vmem:[%s381 + $0x78] sm:$0xff]
        %v969 = vsel %vm922, %v903, %v968
        %970 = vst [vmem:[%s381 + $0x78] sm:$0xff] %v969
        %v971 = vld [vmem:[#allocation2] sm:$0xff]
        %v972 = vld [vmem:[#allocation2 + $0x8] sm:$0xff]
        %v973 = vld [vmem:[#allocation2 + $0x10] sm:$0xff]
        %v974 = vld [vmem:[#allocation2 + $0x18] sm:$0xff]
        %v975 = vld [vmem:[#allocation2 + $0x20] sm:$0xff]
        %v976 = vld [vmem:[#allocation2 + $0x28] sm:$0xff]
        %v977 = vld [vmem:[#allocation2 + $0x30] sm:$0xff]
        %v978 = vld [vmem:[#allocation2 + $0x38] sm:$0xff]
        %v979 = vld [vmem:[#allocation2 + $0x40] sm:$0xff]
        %v980 = vld [vmem:[#allocation2 + $0x48] sm:$0xff]
        %v981 = vld [vmem:[#allocation2 + $0x50] sm:$0xff]
        %v982 = vld [vmem:[#allocation2 + $0x58] sm:$0xff]
        %v983 = vld [vmem:[#allocation2 + $0x60] sm:$0xff]
        %v984 = vld [vmem:[#allocation2 + $0x68] sm:$0xff]
        %v985 = vld [vmem:[#allocation2 + $0x70] sm:$0xff]
        %v986 = vld [vmem:[#allocation2 + $0x78] sm:$0xff]
        %v987 = vld [vmem:[#allocation2 + $0x80] sm:$0xff]
        %v988 = vld [vmem:[#allocation2 + $0x88] sm:$0xff]
        %v989 = vld [vmem:[#allocation6] sm:$0xf]
        %v990 = vld [vmem:[#allocation6 + $0x4] sm:$0x3]
        %v993 = vunpack.c.l.b16 %v989
        %v994 = vunpack.c.l.b16 %v990
        %v995 = vpack.c.b16 %v994, %v993
        %v997 = vsel %vm377, %v971, 0
        %v1000 = vsel %vm377, %v972, 0
        %v1003 = vsel %vm377, %v973, 0
        %v1006 = vsel %vm377, %v974, 0
        %v1009 = vsel %vm377, %v975, 0
        %v1012 = vsel %vm377, %v976, 0
        %v1015 = vsel %vm377, %v977, 0
        %v1018 = vsel %vm377, %v978, 0
        %v1021 = vsel %vm377, %v979, 0
        %v1024 = vsel %vm377, %v980, 0
        %v1027 = vsel %vm377, %v981, 0
        %v1030 = vsel %vm377, %v982, 0
        %v1033 = vsel %vm377, %v983, 0
        %v1036 = vsel %vm377, %v984, 0
        %v1039 = vsel %vm377, %v985, 0
        %v1042 = vsel %vm377, %v986, 0
        %v1045 = vsel %vm377, %v987, 0
        %v1048 = vsel %vm377, %v988, 0
        %vm1050 = vcmask 1045504
        %v1052 = vsel %vm1050, %v995, 0
        %1054 = vmatprep.subr.bf16.mxu0 0
        %1055 = vmatpush1.bf16.msra.mxu0 %v1052
        %1056 = vmatprep.subr.bf16.mxu0 0
        %1057 = vmatpush1.bf16.msra.mxu0 0
        %1058 = vmatprep.subr.bf16.mxu0 0
        %1059 = vmatpush1.bf16.msra.mxu0 0
        %1060 = vmatprep.subr.bf16.mxu0 0
        %1061 = vmatpush1.bf16.msra.mxu0 0
        %1062 = vmatprep.subr.bf16.mxu0 0
        %1063 = vmatpush1.bf16.msra.mxu0 0
        %1064 = vmatprep.subr.bf16.mxu0 0
        %1065 = vmatpush1.bf16.msra.mxu0 0
        %1066 = vmatprep.subr.bf16.mxu0 0
        %1067 = vmatpush1.bf16.msra.mxu0 0
        %1068 = vmatprep.subr.bf16.mxu0 0
        %1069 = vmatpush1.bf16.msra.mxu0 0
        %1070 = vmatprep.subr.bf16.mxu0 0
        %1071 = vmatpush1.bf16.msra.mxu0 0
        %1072 = vmatprep.subr.bf16.mxu0 0
        %1073 = vmatpush1.bf16.msra.mxu0 0
        %1074 = vmatprep.subr.bf16.mxu0 0
        %1075 = vmatpush1.bf16.msra.mxu0 0
        %1076 = vmatprep.subr.bf16.mxu0 0
        %1077 = vmatpush1.bf16.msra.mxu0 0
        %1078 = vmatprep.subr.bf16.mxu0 0
        %1079 = vmatpush1.bf16.msra.mxu0 0
        %1080 = vmatprep.subr.bf16.mxu0 0
        %1081 = vmatpush1.bf16.msra.mxu0 0
        %1082 = vmatprep.subr.bf16.mxu0 0
        %1083 = vmatpush1.bf16.msra.mxu0 0
        %1084 = vmatprep.subr.bf16.mxu0 0
        %1085 = vmatpush1.bf16.msra.mxu0 0
        %1086 = vmatprep.mubr.bf16.mxu0 0
        %1087 = vmatmul.mubr.bf16.gmra.mrb[0].mxu0 %v997
        %v1088 = vpop.f32.mrb[0].mxu0
        %v1089 = vadd.f32 0.0, %v1088
        %v1090 = vpop.f32.mrb[0].mxu0
        %v1091 = vpop.f32.mrb[0].mxu0
        %v1092 = vadd.f32 0.0, %v1091
        %v1093 = vpop.f32.mrb[0].mxu0
        %1094 = vmatprep.mubr.bf16.mxu0 0
        %1095 = vmatmul.mubr.bf16.gmra.mrb[0].mxu0 %v1000
        %v1096 = vpop.f32.mrb[0].mxu0
        %v1097 = vadd.f32 0.0, %v1096
        %v1098 = vpop.f32.mrb[0].mxu0
        %v1099 = vpop.f32.mrb[0].mxu0
        %v1100 = vadd.f32 0.0, %v1099
        %v1101 = vpop.f32.mrb[0].mxu0
        %1102 = vmatprep.mubr.bf16.mxu0 0
        %1103 = vmatmul.mubr.bf16.gmra.mrb[0].mxu0 %v1003
        %v1104 = vpop.f32.mrb[0].mxu0
        %v1105 = vadd.f32 0.0, %v1104
        %v1106 = vpop.f32.mrb[0].mxu0
        %v1107 = vpop.f32.mrb[0].mxu0
        %v1108 = vadd.f32 0.0, %v1107
        %v1109 = vpop.f32.mrb[0].mxu0
        %1110 = vmatprep.mubr.bf16.mxu0 0
        %1111 = vmatmul.mubr.bf16.gmra.mrb[0].mxu0 %v1006
        %v1112 = vpop.f32.mrb[0].mxu0
        %v1113 = vadd.f32 0.0, %v1112
        %v1114 = vpop.f32.mrb[0].mxu0
        %v1115 = vpop.f32.mrb[0].mxu0
        %v1116 = vadd.f32 0.0, %v1115
        %v1117 = vpop.f32.mrb[0].mxu0
        %1118 = vmatprep.mubr.bf16.mxu0 0
        %1119 = vmatmul.mubr.bf16.gmra.mrb[0].mxu0 %v1009
        %v1120 = vpop.f32.mrb[0].mxu0
        %v1121 = vadd.f32 0.0, %v1120
        %v1122 = vpop.f32.mrb[0].mxu0
        %v1123 = vpop.f32.mrb[0].mxu0
        %v1124 = vadd.f32 0.0, %v1123
        %v1125 = vpop.f32.mrb[0].mxu0
        %1126 = vmatprep.mubr.bf16.mxu0 0
        %1127 = vmatmul.mubr.bf16.gmra.mrb[0].mxu0 %v1012
        %v1128 = vpop.f32.mrb[0].mxu0
        %v1129 = vadd.f32 0.0, %v1128
        %v1130 = vpop.f32.mrb[0].mxu0
        %v1131 = vpop.f32.mrb[0].mxu0
        %v1132 = vadd.f32 0.0, %v1131
        %v1133 = vpop.f32.mrb[0].mxu0
        %1134 = vmatprep.mubr.bf16.mxu0 0
        %1135 = vmatmul.mubr.bf16.gmra.mrb[0].mxu0 %v1015
        %v1136 = vpop.f32.mrb[0].mxu0
        %v1137 = vadd.f32 0.0, %v1136
        %v1138 = vpop.f32.mrb[0].mxu0
        %v1139 = vpop.f32.mrb[0].mxu0
        %v1140 = vadd.f32 0.0, %v1139
        %v1141 = vpop.f32.mrb[0].mxu0
        %1142 = vmatprep.mubr.bf16.mxu0 0
        %1143 = vmatmul.mubr.bf16.gmra.mrb[0].mxu0 %v1018
        %v1144 = vpop.f32.mrb[0].mxu0
        %v1145 = vadd.f32 0.0, %v1144
        %v1146 = vpop.f32.mrb[0].mxu0
        %v1147 = vpop.f32.mrb[0].mxu0
        %v1148 = vadd.f32 0.0, %v1147
        %v1149 = vpop.f32.mrb[0].mxu0
        %1150 = vmatprep.mubr.bf16.mxu0 0
        %1151 = vmatmul.mubr.bf16.gmra.mrb[0].mxu0 %v1021
        %v1152 = vpop.f32.mrb[0].mxu0
        %v1153 = vadd.f32 0.0, %v1152
        %v1154 = vpop.f32.mrb[0].mxu0
        %v1155 = vpop.f32.mrb[0].mxu0
        %v1156 = vadd.f32 0.0, %v1155
        %v1157 = vpop.f32.mrb[0].mxu0
        %1158 = vmatprep.mubr.bf16.mxu0 0
        %1159 = vmatmul.mubr.bf16.gmra.mrb[0].mxu0 %v1024
        %v1160 = vpop.f32.mrb[0].mxu0
        %v1161 = vadd.f32 0.0, %v1160
        %v1162 = vpop.f32.mrb[0].mxu0
        %v1163 = vpop.f32.mrb[0].mxu0
        %v1164 = vadd.f32 0.0, %v1163
        %v1165 = vpop.f32.mrb[0].mxu0
        %1166 = vmatprep.mubr.bf16.mxu0 0
        %1167 = vmatmul.mubr.bf16.gmra.mrb[0].mxu0 %v1027
        %v1168 = vpop.f32.mrb[0].mxu0
        %v1169 = vadd.f32 0.0, %v1168
        %v1170 = vpop.f32.mrb[0].mxu0
        %v1171 = vpop.f32.mrb[0].mxu0
        %v1172 = vadd.f32 0.0, %v1171
        %v1173 = vpop.f32.mrb[0].mxu0
        %1174 = vmatprep.mubr.bf16.mxu0 0
        %1175 = vmatmul.mubr.bf16.gmra.mrb[0].mxu0 %v1030
        %v1176 = vpop.f32.mrb[0].mxu0
        %v1177 = vadd.f32 0.0, %v1176
        %v1178 = vpop.f32.mrb[0].mxu0
        %v1179 = vpop.f32.mrb[0].mxu0
        %v1180 = vadd.f32 0.0, %v1179
        %v1181 = vpop.f32.mrb[0].mxu0
        %1182 = vmatprep.mubr.bf16.mxu0 0
        %1183 = vmatmul.mubr.bf16.gmra.mrb[0].mxu0 %v1033
        %v1184 = vpop.f32.mrb[0].mxu0
        %v1185 = vadd.f32 0.0, %v1184
        %v1186 = vpop.f32.mrb[0].mxu0
        %v1187 = vpop.f32.mrb[0].mxu0
        %v1188 = vadd.f32 0.0, %v1187
        %v1189 = vpop.f32.mrb[0].mxu0
        %1190 = vmatprep.mubr.bf16.mxu0 0
        %1191 = vmatmul.mubr.bf16.gmra.mrb[0].mxu0 %v1036
        %v1192 = vpop.f32.mrb[0].mxu0
        %v1193 = vadd.f32 0.0, %v1192
        %v1194 = vpop.f32.mrb[0].mxu0
        %v1195 = vpop.f32.mrb[0].mxu0
        %v1196 = vadd.f32 0.0, %v1195
        %v1197 = vpop.f32.mrb[0].mxu0
        %1198 = vmatprep.mubr.bf16.mxu0 0
        %1199 = vmatmul.mubr.bf16.gmra.mrb[0].mxu0 %v1039
        %v1200 = vpop.f32.mrb[0].mxu0
        %v1201 = vadd.f32 0.0, %v1200
        %v1202 = vpop.f32.mrb[0].mxu0
        %v1203 = vpop.f32.mrb[0].mxu0
        %v1204 = vadd.f32 0.0, %v1203
        %v1205 = vpop.f32.mrb[0].mxu0
        %1206 = vmatprep.mubr.bf16.mxu0 0
        %1207 = vmatmul.mubr.bf16.gmra.mrb[0].mxu0 %v1042
        %v1208 = vpop.f32.mrb[0].mxu0
        %v1209 = vadd.f32 0.0, %v1208
        %v1210 = vpop.f32.mrb[0].mxu0
        %v1211 = vpop.f32.mrb[0].mxu0
        %v1212 = vadd.f32 0.0, %v1211
        %v1213 = vpop.f32.mrb[0].mxu0
        %1214 = vmatprep.mubr.bf16.mxu0 0
        %1215 = vmatmul.mubr.bf16.gmra.mrb[0].mxu0 %v1045
        %v1216 = vpop.f32.mrb[0].mxu0
        %v1217 = vadd.f32 0.0, %v1216
        %v1218 = vpop.f32.mrb[0].mxu0
        %v1219 = vpop.f32.mrb[0].mxu0
        %v1220 = vadd.f32 0.0, %v1219
        %v1221 = vpop.f32.mrb[0].mxu0
        %1222 = vmatprep.mubr.bf16.mxu0 0
        %1223 = vmatmul.mubr.bf16.gmra.mrb[0].mxu0 %v1048
        %v1224 = vpop.f32.mrb[0].mxu0
        %v1225 = vadd.f32 0.0, %v1224
        %v1226 = vpop.f32.mrb[0].mxu0
        %v1227 = vpop.f32.mrb[0].mxu0
        %v1228 = vadd.f32 0.0, %v1227
        %v1229 = vpop.f32.mrb[0].mxu0
        %1230 = vdwg.mxu0
        %1263 = vrot.lane.b32.xlu0 %v1097, 124
        %v1264 = vpop.permute.xlu0 %1263
        %1265 = vrot.lane.b32.xlu0 %v1100, 124
        %v1266 = vpop.permute.xlu0 %1265
        %1267 = vrot.lane.b32.xlu0 %v1105, 124
        %v1268 = vpop.permute.xlu0 %1267
        %1269 = vrot.lane.b32.xlu0 %v1108, 124
        %v1270 = vpop.permute.xlu0 %1269
        %1271 = vrot.lane.b32.xlu0 %v1113, 124
        %v1272 = vpop.permute.xlu0 %1271
        %1273 = vrot.lane.b32.xlu0 %v1116, 124
        %v1274 = vpop.permute.xlu0 %1273
        %1275 = vrot.lane.b32.xlu0 %v1121, 124
        %v1276 = vpop.permute.xlu0 %1275
        %1277 = vrot.lane.b32.xlu0 %v1124, 124
        %v1278 = vpop.permute.xlu0 %1277
        %1279 = vrot.lane.b32.xlu0 %v1129, 124
        %v1280 = vpop.permute.xlu0 %1279
        %1281 = vrot.lane.b32.xlu0 %v1132, 124
        %v1282 = vpop.permute.xlu0 %1281
        %1283 = vrot.lane.b32.xlu0 %v1137, 124
        %v1284 = vpop.permute.xlu0 %1283
        %1285 = vrot.lane.b32.xlu0 %v1140, 124
        %v1286 = vpop.permute.xlu0 %1285
        %1287 = vrot.lane.b32.xlu0 %v1145, 124
        %v1288 = vpop.permute.xlu0 %1287
        %1289 = vrot.lane.b32.xlu0 %v1148, 124
        %v1290 = vpop.permute.xlu0 %1289
        %1291 = vrot.lane.b32.xlu0 %v1153, 124
        %v1292 = vpop.permute.xlu0 %1291
        %1293 = vrot.lane.b32.xlu0 %v1156, 124
        %v1294 = vpop.permute.xlu0 %1293
        %1295 = vrot.lane.b32.xlu0 %v1161, 124
        %v1296 = vpop.permute.xlu0 %1295
        %1297 = vrot.lane.b32.xlu0 %v1164, 124
        %v1298 = vpop.permute.xlu0 %1297
        %1299 = vrot.lane.b32.xlu0 %v1169, 124
        %v1300 = vpop.permute.xlu0 %1299
        %1301 = vrot.lane.b32.xlu0 %v1172, 124
        %v1302 = vpop.permute.xlu0 %1301
        %1303 = vrot.lane.b32.xlu0 %v1177, 124
        %v1304 = vpop.permute.xlu0 %1303
        %1305 = vrot.lane.b32.xlu0 %v1180, 124
        %v1306 = vpop.permute.xlu0 %1305
        %1307 = vrot.lane.b32.xlu0 %v1185, 124
        %v1308 = vpop.permute.xlu0 %1307
        %1309 = vrot.lane.b32.xlu0 %v1188, 124
        %v1310 = vpop.permute.xlu0 %1309
        %1311 = vrot.lane.b32.xlu0 %v1193, 124
        %v1312 = vpop.permute.xlu0 %1311
        %1313 = vrot.lane.b32.xlu0 %v1196, 124
        %v1314 = vpop.permute.xlu0 %1313
        %1315 = vrot.lane.b32.xlu0 %v1201, 124
        %v1316 = vpop.permute.xlu0 %1315
        %1317 = vrot.lane.b32.xlu0 %v1204, 124
        %v1318 = vpop.permute.xlu0 %1317
        %1319 = vrot.lane.b32.xlu0 %v1209, 124
        %v1320 = vpop.permute.xlu0 %1319
        %1321 = vrot.lane.b32.xlu0 %v1212, 124
        %v1322 = vpop.permute.xlu0 %1321
        %1323 = vrot.lane.b32.xlu0 %v1217, 124
        %v1324 = vpop.permute.xlu0 %1323
        %1325 = vrot.lane.b32.xlu0 %v1220, 124
        %v1326 = vpop.permute.xlu0 %1325
        %v1359 = vadd.f32 %v1089, %v1264
        %v1360 = vadd.f32 %v1092, %v1266
        %v1361 = vadd.f32 %v1097, %v1268
        %v1362 = vadd.f32 %v1100, %v1270
        %v1363 = vadd.f32 %v1105, %v1272
        %v1364 = vadd.f32 %v1108, %v1274
        %v1365 = vadd.f32 %v1113, %v1276
        %v1366 = vadd.f32 %v1116, %v1278
        %v1367 = vadd.f32 %v1121, %v1280
        %v1368 = vadd.f32 %v1124, %v1282
        %v1369 = vadd.f32 %v1129, %v1284
        %v1370 = vadd.f32 %v1132, %v1286
        %v1371 = vadd.f32 %v1137, %v1288
        %v1372 = vadd.f32 %v1140, %v1290
        %v1373 = vadd.f32 %v1145, %v1292
        %v1374 = vadd.f32 %v1148, %v1294
        %v1375 = vadd.f32 %v1153, %v1296
        %v1376 = vadd.f32 %v1156, %v1298
        %v1377 = vadd.f32 %v1161, %v1300
        %v1378 = vadd.f32 %v1164, %v1302
        %v1379 = vadd.f32 %v1169, %v1304
        %v1380 = vadd.f32 %v1172, %v1306
        %v1381 = vadd.f32 %v1177, %v1308
        %v1382 = vadd.f32 %v1180, %v1310
        %v1383 = vadd.f32 %v1185, %v1312
        %v1384 = vadd.f32 %v1188, %v1314
        %v1385 = vadd.f32 %v1193, %v1316
        %v1386 = vadd.f32 %v1196, %v1318
        %v1387 = vadd.f32 %v1201, %v1320
        %v1388 = vadd.f32 %v1204, %v1322
        %v1389 = vadd.f32 %v1209, %v1324
        %v1390 = vadd.f32 %v1212, %v1326
        %1393 = vrot.lane.b32.xlu0 %v1105, 120
        %v1394 = vpop.permute.xlu0 %1393
        %1395 = vrot.lane.b32.xlu0 %v1108, 120
        %v1396 = vpop.permute.xlu0 %1395
        %1397 = vrot.lane.b32.xlu0 %v1113, 120
        %v1398 = vpop.permute.xlu0 %1397
        %1399 = vrot.lane.b32.xlu0 %v1116, 120
        %v1400 = vpop.permute.xlu0 %1399
        %1401 = vrot.lane.b32.xlu0 %v1121, 120
        %v1402 = vpop.permute.xlu0 %1401
        %1403 = vrot.lane.b32.xlu0 %v1124, 120
        %v1404 = vpop.permute.xlu0 %1403
        %1405 = vrot.lane.b32.xlu0 %v1129, 120
        %v1406 = vpop.permute.xlu0 %1405
        %1407 = vrot.lane.b32.xlu0 %v1132, 120
        %v1408 = vpop.permute.xlu0 %1407
        %1409 = vrot.lane.b32.xlu0 %v1137, 120
        %v1410 = vpop.permute.xlu0 %1409
        %1411 = vrot.lane.b32.xlu0 %v1140, 120
        %v1412 = vpop.permute.xlu0 %1411
        %1413 = vrot.lane.b32.xlu0 %v1145, 120
        %v1414 = vpop.permute.xlu0 %1413
        %1415 = vrot.lane.b32.xlu0 %v1148, 120
        %v1416 = vpop.permute.xlu0 %1415
        %1417 = vrot.lane.b32.xlu0 %v1153, 120
        %v1418 = vpop.permute.xlu0 %1417
        %1419 = vrot.lane.b32.xlu0 %v1156, 120
        %v1420 = vpop.permute.xlu0 %1419
        %1421 = vrot.lane.b32.xlu0 %v1161, 120
        %v1422 = vpop.permute.xlu0 %1421
        %1423 = vrot.lane.b32.xlu0 %v1164, 120
        %v1424 = vpop.permute.xlu0 %1423
        %1425 = vrot.lane.b32.xlu0 %v1169, 120
        %v1426 = vpop.permute.xlu0 %1425
        %1427 = vrot.lane.b32.xlu0 %v1172, 120
        %v1428 = vpop.permute.xlu0 %1427
        %1429 = vrot.lane.b32.xlu0 %v1177, 120
        %v1430 = vpop.permute.xlu0 %1429
        %1431 = vrot.lane.b32.xlu0 %v1180, 120
        %v1432 = vpop.permute.xlu0 %1431
        %1433 = vrot.lane.b32.xlu0 %v1185, 120
        %v1434 = vpop.permute.xlu0 %1433
        %1435 = vrot.lane.b32.xlu0 %v1188, 120
        %v1436 = vpop.permute.xlu0 %1435
        %1437 = vrot.lane.b32.xlu0 %v1193, 120
        %v1438 = vpop.permute.xlu0 %1437
        %1439 = vrot.lane.b32.xlu0 %v1196, 120
        %v1440 = vpop.permute.xlu0 %1439
        %1441 = vrot.lane.b32.xlu0 %v1201, 120
        %v1442 = vpop.permute.xlu0 %1441
        %1443 = vrot.lane.b32.xlu0 %v1204, 120
        %v1444 = vpop.permute.xlu0 %1443
        %1445 = vrot.lane.b32.xlu0 %v1209, 120
        %v1446 = vpop.permute.xlu0 %1445
        %1447 = vrot.lane.b32.xlu0 %v1212, 120
        %v1448 = vpop.permute.xlu0 %1447
        %1449 = vrot.lane.b32.xlu0 %v1217, 120
        %v1450 = vpop.permute.xlu0 %1449
        %1451 = vrot.lane.b32.xlu0 %v1220, 120
        %v1452 = vpop.permute.xlu0 %1451
        %1453 = vrot.lane.b32.xlu0 %v1225, 120
        %v1454 = vpop.permute.xlu0 %1453
        %1455 = vrot.lane.b32.xlu0 %v1228, 120
        %v1456 = vpop.permute.xlu0 %1455
        %v1489 = vadd.f32 %v1359, %v1394
        %v1490 = vadd.f32 %v1360, %v1396
        %v1491 = vadd.f32 %v1361, %v1398
        %v1492 = vadd.f32 %v1362, %v1400
        %v1493 = vadd.f32 %v1363, %v1402
        %v1494 = vadd.f32 %v1364, %v1404
        %v1495 = vadd.f32 %v1365, %v1406
        %v1496 = vadd.f32 %v1366, %v1408
        %v1497 = vadd.f32 %v1367, %v1410
        %v1498 = vadd.f32 %v1368, %v1412
        %v1499 = vadd.f32 %v1369, %v1414
        %v1500 = vadd.f32 %v1370, %v1416
        %v1501 = vadd.f32 %v1371, %v1418
        %v1502 = vadd.f32 %v1372, %v1420
        %v1503 = vadd.f32 %v1373, %v1422
        %v1504 = vadd.f32 %v1374, %v1424
        %v1505 = vadd.f32 %v1375, %v1426
        %v1506 = vadd.f32 %v1376, %v1428
        %v1507 = vadd.f32 %v1377, %v1430
        %v1508 = vadd.f32 %v1378, %v1432
        %v1509 = vadd.f32 %v1379, %v1434
        %v1510 = vadd.f32 %v1380, %v1436
        %v1511 = vadd.f32 %v1381, %v1438
        %v1512 = vadd.f32 %v1382, %v1440
        %v1513 = vadd.f32 %v1383, %v1442
        %v1514 = vadd.f32 %v1384, %v1444
        %v1515 = vadd.f32 %v1385, %v1446
        %v1516 = vadd.f32 %v1386, %v1448
        %v1517 = vadd.f32 %v1387, %v1450
        %v1518 = vadd.f32 %v1388, %v1452
        %v1519 = vadd.f32 %v1389, %v1454
        %v1520 = vadd.f32 %v1390, %v1456
        %v1521 = vld [vmem:[#allocation8] sm:$0x1]
        %v1523 = vlaneseq
        %v1524 = vshrl.u32 %v1523, 7
        %v1525 = vsub.s32 0, %v1524
        %v1526 = vrot.slane %v1521, %v1525
        %v1528 = vmul.f32 %v1489, %v1526
        %v1529 = vmul.f32 %v1490, %v1526
        %v1530 = vmul.f32 %v1491, %v1526
        %v1531 = vmul.f32 %v1492, %v1526
        %v1532 = vmul.f32 %v1493, %v1526
        %v1533 = vmul.f32 %v1494, %v1526
        %v1534 = vmul.f32 %v1495, %v1526
        %v1535 = vmul.f32 %v1496, %v1526
        %v1536 = vmul.f32 %v1497, %v1526
        %v1537 = vmul.f32 %v1498, %v1526
        %v1538 = vmul.f32 %v1499, %v1526
        %v1539 = vmul.f32 %v1500, %v1526
        %v1540 = vmul.f32 %v1501, %v1526
        %v1541 = vmul.f32 %v1502, %v1526
        %v1542 = vmul.f32 %v1503, %v1526
        %v1543 = vmul.f32 %v1504, %v1526
        %v1544 = vmul.f32 %v1505, %v1526
        %v1545 = vmul.f32 %v1506, %v1526
        %v1546 = vmul.f32 %v1507, %v1526
        %v1547 = vmul.f32 %v1508, %v1526
        %v1548 = vmul.f32 %v1509, %v1526
        %v1549 = vmul.f32 %v1510, %v1526
        %v1550 = vmul.f32 %v1511, %v1526
        %v1551 = vmul.f32 %v1512, %v1526
        %v1552 = vmul.f32 %v1513, %v1526
        %v1553 = vmul.f32 %v1514, %v1526
        %v1554 = vmul.f32 %v1515, %v1526
        %v1555 = vmul.f32 %v1516, %v1526
        %v1556 = vmul.f32 %v1517, %v1526
        %v1557 = vmul.f32 %v1518, %v1526
        %v1558 = vmul.f32 %v1519, %v1526
        %v1559 = vmul.f32 %v1520, %v1526
        %v1560 = vld [vmem:[#allocation9] sm:$0x1]
        %v1562 = vlaneseq
        %v1563 = vshrl.u32 %v1562, 7
        %v1564 = vsub.s32 0, %v1563
        %v1565 = vrot.slane %v1560, %v1564
        %v1567 = vadd.f32 %v1528, %v1565
        %v1568 = vadd.f32 %v1529, %v1565
        %v1569 = vadd.f32 %v1530, %v1565
        %v1570 = vadd.f32 %v1531, %v1565
        %v1571 = vadd.f32 %v1532, %v1565
        %v1572 = vadd.f32 %v1533, %v1565
        %v1573 = vadd.f32 %v1534, %v1565
        %v1574 = vadd.f32 %v1535, %v1565
        %v1575 = vadd.f32 %v1536, %v1565
        %v1576 = vadd.f32 %v1537, %v1565
        %v1577 = vadd.f32 %v1538, %v1565
        %v1578 = vadd.f32 %v1539, %v1565
        %v1579 = vadd.f32 %v1540, %v1565
        %v1580 = vadd.f32 %v1541, %v1565
        %v1581 = vadd.f32 %v1542, %v1565
        %v1582 = vadd.f32 %v1543, %v1565
        %v1583 = vadd.f32 %v1544, %v1565
        %v1584 = vadd.f32 %v1545, %v1565
        %v1585 = vadd.f32 %v1546, %v1565
        %v1586 = vadd.f32 %v1547, %v1565
        %v1587 = vadd.f32 %v1548, %v1565
        %v1588 = vadd.f32 %v1549, %v1565
        %v1589 = vadd.f32 %v1550, %v1565
        %v1590 = vadd.f32 %v1551, %v1565
        %v1591 = vadd.f32 %v1552, %v1565
        %v1592 = vadd.f32 %v1553, %v1565
        %v1593 = vadd.f32 %v1554, %v1565
        %v1594 = vadd.f32 %v1555, %v1565
        %v1595 = vadd.f32 %v1556, %v1565
        %v1596 = vadd.f32 %v1557, %v1565
        %v1597 = vadd.f32 %v1558, %v1565
        %v1598 = vadd.f32 %v1559, %v1565
        %v1599 = vmax.f32 %v1567, 0.0
        %v1600 = vmax.f32 %v1568, 0.0
        %v1601 = vmax.f32 %v1569, 0.0
        %v1602 = vmax.f32 %v1570, 0.0
        %v1603 = vmax.f32 %v1571, 0.0
        %v1604 = vmax.f32 %v1572, 0.0
        %v1605 = vmax.f32 %v1573, 0.0
        %v1606 = vmax.f32 %v1574, 0.0
        %v1607 = vmax.f32 %v1575, 0.0
        %v1608 = vmax.f32 %v1576, 0.0
        %v1609 = vmax.f32 %v1577, 0.0
        %v1610 = vmax.f32 %v1578, 0.0
        %v1611 = vmax.f32 %v1579, 0.0
        %v1612 = vmax.f32 %v1580, 0.0
        %v1613 = vmax.f32 %v1581, 0.0
        %v1614 = vmax.f32 %v1582, 0.0
        %v1615 = vmax.f32 %v1583, 0.0
        %v1616 = vmax.f32 %v1584, 0.0
        %v1617 = vmax.f32 %v1585, 0.0
        %v1618 = vmax.f32 %v1586, 0.0
        %v1619 = vmax.f32 %v1587, 0.0
        %v1620 = vmax.f32 %v1588, 0.0
        %v1621 = vmax.f32 %v1589, 0.0
        %v1622 = vmax.f32 %v1590, 0.0
        %v1623 = vmax.f32 %v1591, 0.0
        %v1624 = vmax.f32 %v1592, 0.0
        %v1625 = vmax.f32 %v1593, 0.0
        %v1626 = vmax.f32 %v1594, 0.0
        %v1627 = vmax.f32 %v1595, 0.0
        %v1628 = vmax.f32 %v1596, 0.0
        %v1629 = vmax.f32 %v1597, 0.0
        %v1630 = vmax.f32 %v1598, 0.0
        %v1631 = vpack.c.bf16 %v1600, %v1599
        %v1632 = vpack.c.bf16 %v1602, %v1601
        %v1633 = vpack.c.bf16 %v1604, %v1603
        %v1634 = vpack.c.bf16 %v1606, %v1605
        %v1635 = vpack.c.bf16 %v1608, %v1607
        %v1636 = vpack.c.bf16 %v1610, %v1609
        %v1637 = vpack.c.bf16 %v1612, %v1611
        %v1638 = vpack.c.bf16 %v1614, %v1613
        %v1639 = vpack.c.bf16 %v1616, %v1615
        %v1640 = vpack.c.bf16 %v1618, %v1617
        %v1641 = vpack.c.bf16 %v1620, %v1619
        %v1642 = vpack.c.bf16 %v1622, %v1621
        %v1643 = vpack.c.bf16 %v1624, %v1623
        %v1644 = vpack.c.bf16 %v1626, %v1625
        %v1645 = vpack.c.bf16 %v1628, %v1627
        %v1646 = vpack.c.bf16 %v1630, %v1629
        %v1648 = vshrl.u32 %v1631, 16
        %v1650 = vrot.slane %v1648, 7
        %v1651 = vshll.u32 %v1631, 16
        %v1653 = vor.u32 %v1650, %v1651
        %v1655 = vshrl.u32 %v1632, 16
        %v1657 = vrot.slane %v1655, 7
        %v1658 = vshll.u32 %v1632, 16
        %v1660 = vor.u32 %v1657, %v1658
        %v1662 = vshrl.u32 %v1633, 16
        %v1664 = vrot.slane %v1662, 7
        %v1665 = vshll.u32 %v1633, 16
        %v1667 = vor.u32 %v1664, %v1665
        %v1669 = vshrl.u32 %v1634, 16
        %v1671 = vrot.slane %v1669, 7
        %v1672 = vshll.u32 %v1634, 16
        %v1674 = vor.u32 %v1671, %v1672
        %v1676 = vshrl.u32 %v1635, 16
        %v1678 = vrot.slane %v1676, 7
        %v1679 = vshll.u32 %v1635, 16
        %v1681 = vor.u32 %v1678, %v1679
        %v1683 = vshrl.u32 %v1636, 16
        %v1685 = vrot.slane %v1683, 7
        %v1686 = vshll.u32 %v1636, 16
        %v1688 = vor.u32 %v1685, %v1686
        %v1690 = vshrl.u32 %v1637, 16
        %v1692 = vrot.slane %v1690, 7
        %v1693 = vshll.u32 %v1637, 16
        %v1695 = vor.u32 %v1692, %v1693
        %v1697 = vshrl.u32 %v1638, 16
        %v1699 = vrot.slane %v1697, 7
        %v1700 = vshll.u32 %v1638, 16
        %v1702 = vor.u32 %v1699, %v1700
        %v1704 = vshrl.u32 %v1639, 16
        %v1706 = vrot.slane %v1704, 7
        %v1707 = vshll.u32 %v1639, 16
        %v1709 = vor.u32 %v1706, %v1707
        %v1711 = vshrl.u32 %v1640, 16
        %v1713 = vrot.slane %v1711, 7
        %v1714 = vshll.u32 %v1640, 16
        %v1716 = vor.u32 %v1713, %v1714
        %v1718 = vshrl.u32 %v1641, 16
        %v1720 = vrot.slane %v1718, 7
        %v1721 = vshll.u32 %v1641, 16
        %v1723 = vor.u32 %v1720, %v1721
        %v1725 = vshrl.u32 %v1642, 16
        %v1727 = vrot.slane %v1725, 7
        %v1728 = vshll.u32 %v1642, 16
        %v1730 = vor.u32 %v1727, %v1728
        %v1732 = vshrl.u32 %v1643, 16
        %v1734 = vrot.slane %v1732, 7
        %v1735 = vshll.u32 %v1643, 16
        %v1737 = vor.u32 %v1734, %v1735
        %v1739 = vshrl.u32 %v1644, 16
        %v1741 = vrot.slane %v1739, 7
        %v1742 = vshll.u32 %v1644, 16
        %v1744 = vor.u32 %v1741, %v1742
        %v1746 = vshrl.u32 %v1645, 16
        %v1748 = vrot.slane %v1746, 7
        %v1749 = vshll.u32 %v1645, 16
        %v1751 = vor.u32 %v1748, %v1749
        %v1753 = vshrl.u32 %v1646, 16
        %v1755 = vrot.slane %v1753, 7
        %v1756 = vshll.u32 %v1646, 16
        %v1758 = vor.u32 %v1755, %v1756
        %v1775 = vld [vmem:[%s381] sm:$0xff]
        %v1776 = vsel %vm726, %v1653, %v1775
        %1777 = vst [vmem:[%s381] sm:$0xff] %v1776
        %v1778 = vld [vmem:[%s381 + $0x8] sm:$0xff]
        %v1779 = vsel %vm726, %v1660, %v1778
        %1780 = vst [vmem:[%s381 + $0x8] sm:$0xff] %v1779
        %v1781 = vld [vmem:[%s381 + $0x10] sm:$0xff]
        %v1782 = vsel %vm726, %v1667, %v1781
        %1783 = vst [vmem:[%s381 + $0x10] sm:$0xff] %v1782
        %v1784 = vld [vmem:[%s381 + $0x18] sm:$0xff]
        %v1785 = vsel %vm726, %v1674, %v1784
        %1786 = vst [vmem:[%s381 + $0x18] sm:$0xff] %v1785
        %v1787 = vld [vmem:[%s381 + $0x20] sm:$0xff]
        %v1788 = vsel %vm726, %v1681, %v1787
        %1789 = vst [vmem:[%s381 + $0x20] sm:$0xff] %v1788
        %v1790 = vld [vmem:[%s381 + $0x28] sm:$0xff]
        %v1791 = vsel %vm726, %v1688, %v1790
        %1792 = vst [vmem:[%s381 + $0x28] sm:$0xff] %v1791
        %v1793 = vld [vmem:[%s381 + $0x30] sm:$0xff]
        %v1794 = vsel %vm726, %v1695, %v1793
        %1795 = vst [vmem:[%s381 + $0x30] sm:$0xff] %v1794
        %v1796 = vld [vmem:[%s381 + $0x38] sm:$0xff]
        %v1797 = vsel %vm726, %v1702, %v1796
        %1798 = vst [vmem:[%s381 + $0x38] sm:$0xff] %v1797
        %v1799 = vld [vmem:[%s381 + $0x40] sm:$0xff]
        %v1800 = vsel %vm726, %v1709, %v1799
        %1801 = vst [vmem:[%s381 + $0x40] sm:$0xff] %v1800
        %v1802 = vld [vmem:[%s381 + $0x48] sm:$0xff]
        %v1803 = vsel %vm726, %v1716, %v1802
        %1804 = vst [vmem:[%s381 + $0x48] sm:$0xff] %v1803
        %v1805 = vld [vmem:[%s381 + $0x50] sm:$0xff]
        %v1806 = vsel %vm726, %v1723, %v1805
        %1807 = vst [vmem:[%s381 + $0x50] sm:$0xff] %v1806
        %v1808 = vld [vmem:[%s381 + $0x58] sm:$0xff]
        %v1809 = vsel %vm726, %v1730, %v1808
        %1810 = vst [vmem:[%s381 + $0x58] sm:$0xff] %v1809
        %v1811 = vld [vmem:[%s381 + $0x60] sm:$0xff]
        %v1812 = vsel %vm726, %v1737, %v1811
        %1813 = vst [vmem:[%s381 + $0x60] sm:$0xff] %v1812
        %v1814 = vld [vmem:[%s381 + $0x68] sm:$0xff]
        %v1815 = vsel %vm726, %v1744, %v1814
        %1816 = vst [vmem:[%s381 + $0x68] sm:$0xff] %v1815
        %v1817 = vld [vmem:[%s381 + $0x70] sm:$0xff]
        %v1818 = vsel %vm726, %v1751, %v1817
        %1819 = vst [vmem:[%s381 + $0x70] sm:$0xff] %v1818
        %v1820 = vld [vmem:[%s381 + $0x78] sm:$0xff]
        %v1821 = vsel %vm726, %v1758, %v1820
        %1822 = vst [vmem:[%s381 + $0x78] sm:$0xff] %v1821
        %1839 = vrot.lane.b32.xlu0 %v1631, 4
        %v1840 = vpop.permute.xlu0 %1839
        %1841 = vrot.lane.b32.xlu0 %v1632, 4
        %v1842 = vpop.permute.xlu0 %1841
        %1843 = vrot.lane.b32.xlu0 %v1633, 4
        %v1844 = vpop.permute.xlu0 %1843
        %1845 = vrot.lane.b32.xlu0 %v1634, 4
        %v1846 = vpop.permute.xlu0 %1845
        %1847 = vrot.lane.b32.xlu0 %v1635, 4
        %v1848 = vpop.permute.xlu0 %1847
        %1849 = vrot.lane.b32.xlu0 %v1636, 4
        %v1850 = vpop.permute.xlu0 %1849
        %1851 = vrot.lane.b32.xlu0 %v1637, 4
        %v1852 = vpop.permute.xlu0 %1851
        %1853 = vrot.lane.b32.xlu0 %v1638, 4
        %v1854 = vpop.permute.xlu0 %1853
        %1855 = vrot.lane.b32.xlu0 %v1639, 4
        %v1856 = vpop.permute.xlu0 %1855
        %1857 = vrot.lane.b32.xlu0 %v1640, 4
        %v1858 = vpop.permute.xlu0 %1857
        %1859 = vrot.lane.b32.xlu0 %v1641, 4
        %v1860 = vpop.permute.xlu0 %1859
        %1861 = vrot.lane.b32.xlu0 %v1642, 4
        %v1862 = vpop.permute.xlu0 %1861
        %1863 = vrot.lane.b32.xlu0 %v1643, 4
        %v1864 = vpop.permute.xlu0 %1863
        %1865 = vrot.lane.b32.xlu0 %v1644, 4
        %v1866 = vpop.permute.xlu0 %1865
        %1867 = vrot.lane.b32.xlu0 %v1645, 4
        %v1868 = vpop.permute.xlu0 %1867
        %1869 = vrot.lane.b32.xlu0 %v1646, 4
        %v1870 = vpop.permute.xlu0 %1869
        %1887 = vst.msk [vmem:[%s381] sm:$0xff] %vm823, %v1840
        %1888 = vst.msk [vmem:[%s381 + $0x8] sm:$0xff] %vm823, %v1842
        %1889 = vst.msk [vmem:[%s381 + $0x10] sm:$0xff] %vm823, %v1844
        %1890 = vst.msk [vmem:[%s381 + $0x18] sm:$0xff] %vm823, %v1846
        %1891 = vst.msk [vmem:[%s381 + $0x20] sm:$0xff] %vm823, %v1848
        %1892 = vst.msk [vmem:[%s381 + $0x28] sm:$0xff] %vm823, %v1850
        %1893 = vst.msk [vmem:[%s381 + $0x30] sm:$0xff] %vm823, %v1852
        %1894 = vst.msk [vmem:[%s381 + $0x38] sm:$0xff] %vm823, %v1854
        %1895 = vst.msk [vmem:[%s381 + $0x40] sm:$0xff] %vm823, %v1856
        %1896 = vst.msk [vmem:[%s381 + $0x48] sm:$0xff] %vm823, %v1858
        %1897 = vst.msk [vmem:[%s381 + $0x50] sm:$0xff] %vm823, %v1860
        %1898 = vst.msk [vmem:[%s381 + $0x58] sm:$0xff] %vm823, %v1862
        %1899 = vst.msk [vmem:[%s381 + $0x60] sm:$0xff] %vm823, %v1864
        %1900 = vst.msk [vmem:[%s381 + $0x68] sm:$0xff] %vm823, %v1866
        %1901 = vst.msk [vmem:[%s381 + $0x70] sm:$0xff] %vm823, %v1868
        %1902 = vst.msk [vmem:[%s381 + $0x78] sm:$0xff] %vm823, %v1870
        %v1903 = vrot.slane %v1651, 1
        %v1904 = vor.u32 %v1648, %v1903
        %v1905 = vrot.slane %v1658, 1
        %v1906 = vor.u32 %v1655, %v1905
        %v1907 = vrot.slane %v1665, 1
        %v1908 = vor.u32 %v1662, %v1907
        %v1909 = vrot.slane %v1672, 1
        %v1910 = vor.u32 %v1669, %v1909
        %v1911 = vrot.slane %v1679, 1
        %v1912 = vor.u32 %v1676, %v1911
        %v1913 = vrot.slane %v1686, 1
        %v1914 = vor.u32 %v1683, %v1913
        %v1915 = vrot.slane %v1693, 1
        %v1916 = vor.u32 %v1690, %v1915
        %v1917 = vrot.slane %v1700, 1
        %v1918 = vor.u32 %v1697, %v1917
        %v1919 = vrot.slane %v1707, 1
        %v1920 = vor.u32 %v1704, %v1919
        %v1921 = vrot.slane %v1714, 1
        %v1922 = vor.u32 %v1711, %v1921
        %v1923 = vrot.slane %v1721, 1
        %v1924 = vor.u32 %v1718, %v1923
        %v1925 = vrot.slane %v1728, 1
        %v1926 = vor.u32 %v1725, %v1925
        %v1927 = vrot.slane %v1735, 1
        %v1928 = vor.u32 %v1732, %v1927
        %v1929 = vrot.slane %v1742, 1
        %v1930 = vor.u32 %v1739, %v1929
        %v1931 = vrot.slane %v1749, 1
        %v1932 = vor.u32 %v1746, %v1931
        %v1933 = vrot.slane %v1756, 1
        %v1934 = vor.u32 %v1753, %v1933
        %1935 = vrot.lane.b32.xlu0 %v1904, 8
        %v1936 = vpop.permute.xlu0 %1935
        %1937 = vrot.lane.b32.xlu0 %v1906, 8
        %v1938 = vpop.permute.xlu0 %1937
        %1939 = vrot.lane.b32.xlu0 %v1908, 8
        %v1940 = vpop.permute.xlu0 %1939
        %1941 = vrot.lane.b32.xlu0 %v1910, 8
        %v1942 = vpop.permute.xlu0 %1941
        %1943 = vrot.lane.b32.xlu0 %v1912, 8
        %v1944 = vpop.permute.xlu0 %1943
        %1945 = vrot.lane.b32.xlu0 %v1914, 8
        %v1946 = vpop.permute.xlu0 %1945
        %1947 = vrot.lane.b32.xlu0 %v1916, 8
        %v1948 = vpop.permute.xlu0 %1947
        %1949 = vrot.lane.b32.xlu0 %v1918, 8
        %v1950 = vpop.permute.xlu0 %1949
        %1951 = vrot.lane.b32.xlu0 %v1920, 8
        %v1952 = vpop.permute.xlu0 %1951
        %1953 = vrot.lane.b32.xlu0 %v1922, 8
        %v1954 = vpop.permute.xlu0 %1953
        %1955 = vrot.lane.b32.xlu0 %v1924, 8
        %v1956 = vpop.permute.xlu0 %1955
        %1957 = vrot.lane.b32.xlu0 %v1926, 8
        %v1958 = vpop.permute.xlu0 %1957
        %1959 = vrot.lane.b32.xlu0 %v1928, 8
        %v1960 = vpop.permute.xlu0 %1959
        %1961 = vrot.lane.b32.xlu0 %v1930, 8
        %v1962 = vpop.permute.xlu0 %1961
        %1963 = vrot.lane.b32.xlu0 %v1932, 8
        %v1964 = vpop.permute.xlu0 %1963
        %1965 = vrot.lane.b32.xlu0 %v1934, 8
        %v1966 = vpop.permute.xlu0 %1965
        %v1983 = vld [vmem:[%s381] sm:$0xff]
        %v1984 = vsel %vm922, %v1936, %v1983
        %1985 = vst [vmem:[%s381] sm:$0xff] %v1984
        %v1986 = vld [vmem:[%s381 + $0x8] sm:$0xff]
        %v1987 = vsel %vm922, %v1938, %v1986
        %1988 = vst [vmem:[%s381 + $0x8] sm:$0xff] %v1987
        %v1989 = vld [vmem:[%s381 + $0x10] sm:$0xff]
        %v1990 = vsel %vm922, %v1940, %v1989
        %1991 = vst [vmem:[%s381 + $0x10] sm:$0xff] %v1990
        %v1992 = vld [vmem:[%s381 + $0x18] sm:$0xff]
        %v1993 = vsel %vm922, %v1942, %v1992
        %1994 = vst [vmem:[%s381 + $0x18] sm:$0xff] %v1993
        %v1995 = vld [vmem:[%s381 + $0x20] sm:$0xff]
        %v1996 = vsel %vm922, %v1944, %v1995
        %1997 = vst [vmem:[%s381 + $0x20] sm:$0xff] %v1996
        %v1998 = vld [vmem:[%s381 + $0x28] sm:$0xff]
        %v1999 = vsel %vm922, %v1946, %v1998
        %2000 = vst [vmem:[%s381 + $0x28] sm:$0xff] %v1999
        %v2001 = vld [vmem:[%s381 + $0x30] sm:$0xff]
        %v2002 = vsel %vm922, %v1948, %v2001
        %2003 = vst [vmem:[%s381 + $0x30] sm:$0xff] %v2002
        %v2004 = vld [vmem:[%s381 + $0x38] sm:$0xff]
        %v2005 = vsel %vm922, %v1950, %v2004
        %2006 = vst [vmem:[%s381 + $0x38] sm:$0xff] %v2005
        %v2007 = vld [vmem:[%s381 + $0x40] sm:$0xff]
        %v2008 = vsel %vm922, %v1952, %v2007
        %2009 = vst [vmem:[%s381 + $0x40] sm:$0xff] %v2008
        %v2010 = vld [vmem:[%s381 + $0x48] sm:$0xff]
        %v2011 = vsel %vm922, %v1954, %v2010
        %2012 = vst [vmem:[%s381 + $0x48] sm:$0xff] %v2011
        %v2013 = vld [vmem:[%s381 + $0x50] sm:$0xff]
        %v2014 = vsel %vm922, %v1956, %v2013
        %2015 = vst [vmem:[%s381 + $0x50] sm:$0xff] %v2014
        %v2016 = vld [vmem:[%s381 + $0x58] sm:$0xff]
        %v2017 = vsel %vm922, %v1958, %v2016
        %2018 = vst [vmem:[%s381 + $0x58] sm:$0xff] %v2017
        %v2019 = vld [vmem:[%s381 + $0x60] sm:$0xff]
        %v2020 = vsel %vm922, %v1960, %v2019
        %2021 = vst [vmem:[%s381 + $0x60] sm:$0xff] %v2020
        %v2022 = vld [vmem:[%s381 + $0x68] sm:$0xff]
        %v2023 = vsel %vm922, %v1962, %v2022
        %2024 = vst [vmem:[%s381 + $0x68] sm:$0xff] %v2023
        %v2025 = vld [vmem:[%s381 + $0x70] sm:$0xff]
        %v2026 = vsel %vm922, %v1964, %v2025
        %2027 = vst [vmem:[%s381 + $0x70] sm:$0xff] %v2026
        %v2028 = vld [vmem:[%s381 + $0x78] sm:$0xff]
        %v2029 = vsel %vm922, %v1966, %v2028
        %2030 = vst [vmem:[%s381 + $0x78] sm:$0xff] %v2029
        %v2031 = vld [vmem:[#allocation2] sm:$0xff]
        %v2032 = vld [vmem:[#allocation2 + $0x8] sm:$0xff]
        %v2033 = vld [vmem:[#allocation2 + $0x10] sm:$0xff]
        %v2034 = vld [vmem:[#allocation2 + $0x18] sm:$0xff]
        %v2035 = vld [vmem:[#allocation2 + $0x20] sm:$0xff]
        %v2036 = vld [vmem:[#allocation2 + $0x28] sm:$0xff]
        %v2037 = vld [vmem:[#allocation2 + $0x30] sm:$0xff]
        %v2038 = vld [vmem:[#allocation2 + $0x38] sm:$0xff]
        %v2039 = vld [vmem:[#allocation2 + $0x40] sm:$0xff]
        %v2040 = vld [vmem:[#allocation2 + $0x48] sm:$0xff]
        %v2041 = vld [vmem:[#allocation2 + $0x50] sm:$0xff]
        %v2042 = vld [vmem:[#allocation2 + $0x58] sm:$0xff]
        %v2043 = vld [vmem:[#allocation2 + $0x60] sm:$0xff]
        %v2044 = vld [vmem:[#allocation2 + $0x68] sm:$0xff]
        %v2045 = vld [vmem:[#allocation2 + $0x70] sm:$0xff]
        %v2046 = vld [vmem:[#allocation2 + $0x78] sm:$0xff]
        %v2047 = vld [vmem:[#allocation2 + $0x80] sm:$0xff]
        %v2048 = vld [vmem:[#allocation2 + $0x88] sm:$0xff]
        %v2049 = vld [vmem:[#allocation11] sm:$0xf]
        %v2050 = vld [vmem:[#allocation11 + $0x4] sm:$0x3]
        %v2053 = vunpack.c.l.b16 %v2049
        %v2054 = vunpack.c.l.b16 %v2050
        %v2055 = vpack.c.b16 %v2054, %v2053
        %v2057 = vsel %vm377, %v2031, 0
        %v2060 = vsel %vm377, %v2032, 0
        %v2063 = vsel %vm377, %v2033, 0
        %v2066 = vsel %vm377, %v2034, 0
        %v2069 = vsel %vm377, %v2035, 0
        %v2072 = vsel %vm377, %v2036, 0
        %v2075 = vsel %vm377, %v2037, 0
        %v2078 = vsel %vm377, %v2038, 0
        %v2081 = vsel %vm377, %v2039, 0
        %v2084 = vsel %vm377, %v2040, 0
        %v2087 = vsel %vm377, %v2041, 0
        %v2090 = vsel %vm377, %v2042, 0
        %v2093 = vsel %vm377, %v2043, 0
        %v2096 = vsel %vm377, %v2044, 0
        %v2099 = vsel %vm377, %v2045, 0
        %v2102 = vsel %vm377, %v2046, 0
        %v2105 = vsel %vm377, %v2047, 0
        %v2108 = vsel %vm377, %v2048, 0
        %v2111 = vsel %vm1050, %v2055, 0
        %2113 = vmatprep.subr.bf16.mxu0 0
        %2114 = vmatpush1.bf16.msra.mxu0 %v2111
        %2115 = vmatprep.subr.bf16.mxu0 0
        %2116 = vmatpush1.bf16.msra.mxu0 0
        %2117 = vmatprep.subr.bf16.mxu0 0
        %2118 = vmatpush1.bf16.msra.mxu0 0
        %2119 = vmatprep.subr.bf16.mxu0 0
        %2120 = vmatpush1.bf16.msra.mxu0 0
        %2121 = vmatprep.subr.bf16.mxu0 0
        %2122 = vmatpush1.bf16.msra.mxu0 0
        %2123 = vmatprep.subr.bf16.mxu0 0
        %2124 = vmatpush1.bf16.msra.mxu0 0
        %2125 = vmatprep.subr.bf16.mxu0 0
        %2126 = vmatpush1.bf16.msra.mxu0 0
        %2127 = vmatprep.subr.bf16.mxu0 0
        %2128 = vmatpush1.bf16.msra.mxu0 0
        %2129 = vmatprep.subr.bf16.mxu0 0
        %2130 = vmatpush1.bf16.msra.mxu0 0
        %2131 = vmatprep.subr.bf16.mxu0 0
        %2132 = vmatpush1.bf16.msra.mxu0 0
        %2133 = vmatprep.subr.bf16.mxu0 0
        %2134 = vmatpush1.bf16.msra.mxu0 0
        %2135 = vmatprep.subr.bf16.mxu0 0
        %2136 = vmatpush1.bf16.msra.mxu0 0
        %2137 = vmatprep.subr.bf16.mxu0 0
        %2138 = vmatpush1.bf16.msra.mxu0 0
        %2139 = vmatprep.subr.bf16.mxu0 0
        %2140 = vmatpush1.bf16.msra.mxu0 0
        %2141 = vmatprep.subr.bf16.mxu0 0
        %2142 = vmatpush1.bf16.msra.mxu0 0
        %2143 = vmatprep.subr.bf16.mxu0 0
        %2144 = vmatpush1.bf16.msra.mxu0 0
        %2145 = vmatprep.mubr.bf16.mxu0 0
        %2146 = vmatmul.mubr.bf16.gmra.mrb[0].mxu0 %v2057
        %v2147 = vpop.f32.mrb[0].mxu0
        %v2148 = vadd.f32 0.0, %v2147
        %v2149 = vpop.f32.mrb[0].mxu0
        %v2150 = vpop.f32.mrb[0].mxu0
        %v2151 = vadd.f32 0.0, %v2150
        %v2152 = vpop.f32.mrb[0].mxu0
        %2153 = vmatprep.mubr.bf16.mxu0 0
        %2154 = vmatmul.mubr.bf16.gmra.mrb[0].mxu0 %v2060
        %v2155 = vpop.f32.mrb[0].mxu0
        %v2156 = vadd.f32 0.0, %v2155
        %v2157 = vpop.f32.mrb[0].mxu0
        %v2158 = vpop.f32.mrb[0].mxu0
        %v2159 = vadd.f32 0.0, %v2158
        %v2160 = vpop.f32.mrb[0].mxu0
        %2161 = vmatprep.mubr.bf16.mxu0 0
        %2162 = vmatmul.mubr.bf16.gmra.mrb[0].mxu0 %v2063
        %v2163 = vpop.f32.mrb[0].mxu0
        %v2164 = vadd.f32 0.0, %v2163
        %v2165 = vpop.f32.mrb[0].mxu0
        %v2166 = vpop.f32.mrb[0].mxu0
        %v2167 = vadd.f32 0.0, %v2166
        %v2168 = vpop.f32.mrb[0].mxu0
        %2169 = vmatprep.mubr.bf16.mxu0 0
        %2170 = vmatmul.mubr.bf16.gmra.mrb[0].mxu0 %v2066
        %v2171 = vpop.f32.mrb[0].mxu0
        %v2172 = vadd.f32 0.0, %v2171
        %v2173 = vpop.f32.mrb[0].mxu0
        %v2174 = vpop.f32.mrb[0].mxu0
        %v2175 = vadd.f32 0.0, %v2174
        %v2176 = vpop.f32.mrb[0].mxu0
        %2177 = vmatprep.mubr.bf16.mxu0 0
        %2178 = vmatmul.mubr.bf16.gmra.mrb[0].mxu0 %v2069
        %v2179 = vpop.f32.mrb[0].mxu0
        %v2180 = vadd.f32 0.0, %v2179
        %v2181 = vpop.f32.mrb[0].mxu0
        %v2182 = vpop.f32.mrb[0].mxu0
        %v2183 = vadd.f32 0.0, %v2182
        %v2184 = vpop.f32.mrb[0].mxu0
        %2185 = vmatprep.mubr.bf16.mxu0 0
        %2186 = vmatmul.mubr.bf16.gmra.mrb[0].mxu0 %v2072
        %v2187 = vpop.f32.mrb[0].mxu0
        %v2188 = vadd.f32 0.0, %v2187
        %v2189 = vpop.f32.mrb[0].mxu0
        %v2190 = vpop.f32.mrb[0].mxu0
        %v2191 = vadd.f32 0.0, %v2190
        %v2192 = vpop.f32.mrb[0].mxu0
        %2193 = vmatprep.mubr.bf16.mxu0 0
        %2194 = vmatmul.mubr.bf16.gmra.mrb[0].mxu0 %v2075
        %v2195 = vpop.f32.mrb[0].mxu0
        %v2196 = vadd.f32 0.0, %v2195
        %v2197 = vpop.f32.mrb[0].mxu0
        %v2198 = vpop.f32.mrb[0].mxu0
        %v2199 = vadd.f32 0.0, %v2198
        %v2200 = vpop.f32.mrb[0].mxu0
        %2201 = vmatprep.mubr.bf16.mxu0 0
        %2202 = vmatmul.mubr.bf16.gmra.mrb[0].mxu0 %v2078
        %v2203 = vpop.f32.mrb[0].mxu0
        %v2204 = vadd.f32 0.0, %v2203
        %v2205 = vpop.f32.mrb[0].mxu0
        %v2206 = vpop.f32.mrb[0].mxu0
        %v2207 = vadd.f32 0.0, %v2206
        %v2208 = vpop.f32.mrb[0].mxu0
        %2209 = vmatprep.mubr.bf16.mxu0 0
        %2210 = vmatmul.mubr.bf16.gmra.mrb[0].mxu0 %v2081
        %v2211 = vpop.f32.mrb[0].mxu0
        %v2212 = vadd.f32 0.0, %v2211
        %v2213 = vpop.f32.mrb[0].mxu0
        %v2214 = vpop.f32.mrb[0].mxu0
        %v2215 = vadd.f32 0.0, %v2214
        %v2216 = vpop.f32.mrb[0].mxu0
        %2217 = vmatprep.mubr.bf16.mxu0 0
        %2218 = vmatmul.mubr.bf16.gmra.mrb[0].mxu0 %v2084
        %v2219 = vpop.f32.mrb[0].mxu0
        %v2220 = vadd.f32 0.0, %v2219
        %v2221 = vpop.f32.mrb[0].mxu0
        %v2222 = vpop.f32.mrb[0].mxu0
        %v2223 = vadd.f32 0.0, %v2222
        %v2224 = vpop.f32.mrb[0].mxu0
        %2225 = vmatprep.mubr.bf16.mxu0 0
        %2226 = vmatmul.mubr.bf16.gmra.mrb[0].mxu0 %v2087
        %v2227 = vpop.f32.mrb[0].mxu0
        %v2228 = vadd.f32 0.0, %v2227
        %v2229 = vpop.f32.mrb[0].mxu0
        %v2230 = vpop.f32.mrb[0].mxu0
        %v2231 = vadd.f32 0.0, %v2230
        %v2232 = vpop.f32.mrb[0].mxu0
        %2233 = vmatprep.mubr.bf16.mxu0 0
        %2234 = vmatmul.mubr.bf16.gmra.mrb[0].mxu0 %v2090
        %v2235 = vpop.f32.mrb[0].mxu0
        %v2236 = vadd.f32 0.0, %v2235
        %v2237 = vpop.f32.mrb[0].mxu0
        %v2238 = vpop.f32.mrb[0].mxu0
        %v2239 = vadd.f32 0.0, %v2238
        %v2240 = vpop.f32.mrb[0].mxu0
        %2241 = vmatprep.mubr.bf16.mxu0 0
        %2242 = vmatmul.mubr.bf16.gmra.mrb[0].mxu0 %v2093
        %v2243 = vpop.f32.mrb[0].mxu0
        %v2244 = vadd.f32 0.0, %v2243
        %v2245 = vpop.f32.mrb[0].mxu0
        %v2246 = vpop.f32.mrb[0].mxu0
        %v2247 = vadd.f32 0.0, %v2246
        %v2248 = vpop.f32.mrb[0].mxu0
        %2249 = vmatprep.mubr.bf16.mxu0 0
        %2250 = vmatmul.mubr.bf16.gmra.mrb[0].mxu0 %v2096
        %v2251 = vpop.f32.mrb[0].mxu0
        %v2252 = vadd.f32 0.0, %v2251
        %v2253 = vpop.f32.mrb[0].mxu0
        %v2254 = vpop.f32.mrb[0].mxu0
        %v2255 = vadd.f32 0.0, %v2254
        %v2256 = vpop.f32.mrb[0].mxu0
        %2257 = vmatprep.mubr.bf16.mxu0 0
        %2258 = vmatmul.mubr.bf16.gmra.mrb[0].mxu0 %v2099
        %v2259 = vpop.f32.mrb[0].mxu0
        %v2260 = vadd.f32 0.0, %v2259
        %v2261 = vpop.f32.mrb[0].mxu0
        %v2262 = vpop.f32.mrb[0].mxu0
        %v2263 = vadd.f32 0.0, %v2262
        %v2264 = vpop.f32.mrb[0].mxu0
        %2265 = vmatprep.mubr.bf16.mxu0 0
        %2266 = vmatmul.mubr.bf16.gmra.mrb[0].mxu0 %v2102
        %v2267 = vpop.f32.mrb[0].mxu0
        %v2268 = vadd.f32 0.0, %v2267
        %v2269 = vpop.f32.mrb[0].mxu0
        %v2270 = vpop.f32.mrb[0].mxu0
        %v2271 = vadd.f32 0.0, %v2270
        %v2272 = vpop.f32.mrb[0].mxu0
        %2273 = vmatprep.mubr.bf16.mxu0 0
        %2274 = vmatmul.mubr.bf16.gmra.mrb[0].mxu0 %v2105
        %v2275 = vpop.f32.mrb[0].mxu0
        %v2276 = vadd.f32 0.0, %v2275
        %v2277 = vpop.f32.mrb[0].mxu0
        %v2278 = vpop.f32.mrb[0].mxu0
        %v2279 = vadd.f32 0.0, %v2278
        %v2280 = vpop.f32.mrb[0].mxu0
        %2281 = vmatprep.mubr.bf16.mxu0 0
        %2282 = vmatmul.mubr.bf16.gmra.mrb[0].mxu0 %v2108
        %v2283 = vpop.f32.mrb[0].mxu0
        %v2284 = vadd.f32 0.0, %v2283
        %v2285 = vpop.f32.mrb[0].mxu0
        %v2286 = vpop.f32.mrb[0].mxu0
        %v2287 = vadd.f32 0.0, %v2286
        %v2288 = vpop.f32.mrb[0].mxu0
        %2289 = vdwg.mxu0
        %2322 = vrot.lane.b32.xlu0 %v2156, 124
        %v2323 = vpop.permute.xlu0 %2322
        %2324 = vrot.lane.b32.xlu0 %v2159, 124
        %v2325 = vpop.permute.xlu0 %2324
        %2326 = vrot.lane.b32.xlu0 %v2164, 124
        %v2327 = vpop.permute.xlu0 %2326
        %2328 = vrot.lane.b32.xlu0 %v2167, 124
        %v2329 = vpop.permute.xlu0 %2328
        %2330 = vrot.lane.b32.xlu0 %v2172, 124
        %v2331 = vpop.permute.xlu0 %2330
        %2332 = vrot.lane.b32.xlu0 %v2175, 124
        %v2333 = vpop.permute.xlu0 %2332
        %2334 = vrot.lane.b32.xlu0 %v2180, 124
        %v2335 = vpop.permute.xlu0 %2334
        %2336 = vrot.lane.b32.xlu0 %v2183, 124
        %v2337 = vpop.permute.xlu0 %2336
        %2338 = vrot.lane.b32.xlu0 %v2188, 124
        %v2339 = vpop.permute.xlu0 %2338
        %2340 = vrot.lane.b32.xlu0 %v2191, 124
        %v2341 = vpop.permute.xlu0 %2340
        %2342 = vrot.lane.b32.xlu0 %v2196, 124
        %v2343 = vpop.permute.xlu0 %2342
        %2344 = vrot.lane.b32.xlu0 %v2199, 124
        %v2345 = vpop.permute.xlu0 %2344
        %2346 = vrot.lane.b32.xlu0 %v2204, 124
        %v2347 = vpop.permute.xlu0 %2346
        %2348 = vrot.lane.b32.xlu0 %v2207, 124
        %v2349 = vpop.permute.xlu0 %2348
        %2350 = vrot.lane.b32.xlu0 %v2212, 124
        %v2351 = vpop.permute.xlu0 %2350
        %2352 = vrot.lane.b32.xlu0 %v2215, 124
        %v2353 = vpop.permute.xlu0 %2352
        %2354 = vrot.lane.b32.xlu0 %v2220, 124
        %v2355 = vpop.permute.xlu0 %2354
        %2356 = vrot.lane.b32.xlu0 %v2223, 124
        %v2357 = vpop.permute.xlu0 %2356
        %2358 = vrot.lane.b32.xlu0 %v2228, 124
        %v2359 = vpop.permute.xlu0 %2358
        %2360 = vrot.lane.b32.xlu0 %v2231, 124
        %v2361 = vpop.permute.xlu0 %2360
        %2362 = vrot.lane.b32.xlu0 %v2236, 124
        %v2363 = vpop.permute.xlu0 %2362
        %2364 = vrot.lane.b32.xlu0 %v2239, 124
        %v2365 = vpop.permute.xlu0 %2364
        %2366 = vrot.lane.b32.xlu0 %v2244, 124
        %v2367 = vpop.permute.xlu0 %2366
        %2368 = vrot.lane.b32.xlu0 %v2247, 124
        %v2369 = vpop.permute.xlu0 %2368
        %2370 = vrot.lane.b32.xlu0 %v2252, 124
        %v2371 = vpop.permute.xlu0 %2370
        %2372 = vrot.lane.b32.xlu0 %v2255, 124
        %v2373 = vpop.permute.xlu0 %2372
        %2374 = vrot.lane.b32.xlu0 %v2260, 124
        %v2375 = vpop.permute.xlu0 %2374
        %2376 = vrot.lane.b32.xlu0 %v2263, 124
        %v2377 = vpop.permute.xlu0 %2376
        %2378 = vrot.lane.b32.xlu0 %v2268, 124
        %v2379 = vpop.permute.xlu0 %2378
        %2380 = vrot.lane.b32.xlu0 %v2271, 124
        %v2381 = vpop.permute.xlu0 %2380
        %2382 = vrot.lane.b32.xlu0 %v2276, 124
        %v2383 = vpop.permute.xlu0 %2382
        %2384 = vrot.lane.b32.xlu0 %v2279, 124
        %v2385 = vpop.permute.xlu0 %2384
        %v2418 = vadd.f32 %v2148, %v2323
        %v2419 = vadd.f32 %v2151, %v2325
        %v2420 = vadd.f32 %v2156, %v2327
        %v2421 = vadd.f32 %v2159, %v2329
        %v2422 = vadd.f32 %v2164, %v2331
        %v2423 = vadd.f32 %v2167, %v2333
        %v2424 = vadd.f32 %v2172, %v2335
        %v2425 = vadd.f32 %v2175, %v2337
        %v2426 = vadd.f32 %v2180, %v2339
        %v2427 = vadd.f32 %v2183, %v2341
        %v2428 = vadd.f32 %v2188, %v2343
        %v2429 = vadd.f32 %v2191, %v2345
        %v2430 = vadd.f32 %v2196, %v2347
        %v2431 = vadd.f32 %v2199, %v2349
        %v2432 = vadd.f32 %v2204, %v2351
        %v2433 = vadd.f32 %v2207, %v2353
        %v2434 = vadd.f32 %v2212, %v2355
        %v2435 = vadd.f32 %v2215, %v2357
        %v2436 = vadd.f32 %v2220, %v2359
        %v2437 = vadd.f32 %v2223, %v2361
        %v2438 = vadd.f32 %v2228, %v2363
        %v2439 = vadd.f32 %v2231, %v2365
        %v2440 = vadd.f32 %v2236, %v2367
        %v2441 = vadd.f32 %v2239, %v2369
        %v2442 = vadd.f32 %v2244, %v2371
        %v2443 = vadd.f32 %v2247, %v2373
        %v2444 = vadd.f32 %v2252, %v2375
        %v2445 = vadd.f32 %v2255, %v2377
        %v2446 = vadd.f32 %v2260, %v2379
        %v2447 = vadd.f32 %v2263, %v2381
        %v2448 = vadd.f32 %v2268, %v2383
        %v2449 = vadd.f32 %v2271, %v2385
        %2452 = vrot.lane.b32.xlu0 %v2164, 120
        %v2453 = vpop.permute.xlu0 %2452
        %2454 = vrot.lane.b32.xlu0 %v2167, 120
        %v2455 = vpop.permute.xlu0 %2454
        %2456 = vrot.lane.b32.xlu0 %v2172, 120
        %v2457 = vpop.permute.xlu0 %2456
        %2458 = vrot.lane.b32.xlu0 %v2175, 120
        %v2459 = vpop.permute.xlu0 %2458
        %2460 = vrot.lane.b32.xlu0 %v2180, 120
        %v2461 = vpop.permute.xlu0 %2460
        %2462 = vrot.lane.b32.xlu0 %v2183, 120
        %v2463 = vpop.permute.xlu0 %2462
        %2464 = vrot.lane.b32.xlu0 %v2188, 120
        %v2465 = vpop.permute.xlu0 %2464
        %2466 = vrot.lane.b32.xlu0 %v2191, 120
        %v2467 = vpop.permute.xlu0 %2466
        %2468 = vrot.lane.b32.xlu0 %v2196, 120
        %v2469 = vpop.permute.xlu0 %2468
        %2470 = vrot.lane.b32.xlu0 %v2199, 120
        %v2471 = vpop.permute.xlu0 %2470
        %2472 = vrot.lane.b32.xlu0 %v2204, 120
        %v2473 = vpop.permute.xlu0 %2472
        %2474 = vrot.lane.b32.xlu0 %v2207, 120
        %v2475 = vpop.permute.xlu0 %2474
        %2476 = vrot.lane.b32.xlu0 %v2212, 120
        %v2477 = vpop.permute.xlu0 %2476
        %2478 = vrot.lane.b32.xlu0 %v2215, 120
        %v2479 = vpop.permute.xlu0 %2478
        %2480 = vrot.lane.b32.xlu0 %v2220, 120
        %v2481 = vpop.permute.xlu0 %2480
        %2482 = vrot.lane.b32.xlu0 %v2223, 120
        %v2483 = vpop.permute.xlu0 %2482
        %2484 = vrot.lane.b32.xlu0 %v2228, 120
        %v2485 = vpop.permute.xlu0 %2484
        %2486 = vrot.lane.b32.xlu0 %v2231, 120
        %v2487 = vpop.permute.xlu0 %2486
        %2488 = vrot.lane.b32.xlu0 %v2236, 120
        %v2489 = vpop.permute.xlu0 %2488
        %2490 = vrot.lane.b32.xlu0 %v2239, 120
        %v2491 = vpop.permute.xlu0 %2490
        %2492 = vrot.lane.b32.xlu0 %v2244, 120
        %v2493 = vpop.permute.xlu0 %2492
        %2494 = vrot.lane.b32.xlu0 %v2247, 120
        %v2495 = vpop.permute.xlu0 %2494
        %2496 = vrot.lane.b32.xlu0 %v2252, 120
        %v2497 = vpop.permute.xlu0 %2496
        %2498 = vrot.lane.b32.xlu0 %v2255, 120
        %v2499 = vpop.permute.xlu0 %2498
        %2500 = vrot.lane.b32.xlu0 %v2260, 120
        %v2501 = vpop.permute.xlu0 %2500
        %2502 = vrot.lane.b32.xlu0 %v2263, 120
        %v2503 = vpop.permute.xlu0 %2502
        %2504 = vrot.lane.b32.xlu0 %v2268, 120
        %v2505 = vpop.permute.xlu0 %2504
        %2506 = vrot.lane.b32.xlu0 %v2271, 120
        %v2507 = vpop.permute.xlu0 %2506
        %2508 = vrot.lane.b32.xlu0 %v2276, 120
        %v2509 = vpop.permute.xlu0 %2508
        %2510 = vrot.lane.b32.xlu0 %v2279, 120
        %v2511 = vpop.permute.xlu0 %2510
        %2512 = vrot.lane.b32.xlu0 %v2284, 120
        %v2513 = vpop.permute.xlu0 %2512
        %2514 = vrot.lane.b32.xlu0 %v2287, 120
        %v2515 = vpop.permute.xlu0 %2514
        %v2548 = vadd.f32 %v2418, %v2453
        %v2549 = vadd.f32 %v2419, %v2455
        %v2550 = vadd.f32 %v2420, %v2457
        %v2551 = vadd.f32 %v2421, %v2459
        %v2552 = vadd.f32 %v2422, %v2461
        %v2553 = vadd.f32 %v2423, %v2463
        %v2554 = vadd.f32 %v2424, %v2465
        %v2555 = vadd.f32 %v2425, %v2467
        %v2556 = vadd.f32 %v2426, %v2469
        %v2557 = vadd.f32 %v2427, %v2471
        %v2558 = vadd.f32 %v2428, %v2473
        %v2559 = vadd.f32 %v2429, %v2475
        %v2560 = vadd.f32 %v2430, %v2477
        %v2561 = vadd.f32 %v2431, %v2479
        %v2562 = vadd.f32 %v2432, %v2481
        %v2563 = vadd.f32 %v2433, %v2483
        %v2564 = vadd.f32 %v2434, %v2485
        %v2565 = vadd.f32 %v2435, %v2487
        %v2566 = vadd.f32 %v2436, %v2489
        %v2567 = vadd.f32 %v2437, %v2491
        %v2568 = vadd.f32 %v2438, %v2493
        %v2569 = vadd.f32 %v2439, %v2495
        %v2570 = vadd.f32 %v2440, %v2497
        %v2571 = vadd.f32 %v2441, %v2499
        %v2572 = vadd.f32 %v2442, %v2501
        %v2573 = vadd.f32 %v2443, %v2503
        %v2574 = vadd.f32 %v2444, %v2505
        %v2575 = vadd.f32 %v2445, %v2507
        %v2576 = vadd.f32 %v2446, %v2509
        %v2577 = vadd.f32 %v2447, %v2511
        %v2578 = vadd.f32 %v2448, %v2513
        %v2579 = vadd.f32 %v2449, %v2515
        %v2580 = vld [vmem:[#allocation12] sm:$0x1]
        %v2582 = vlaneseq
        %v2583 = vshrl.u32 %v2582, 7
        %v2584 = vsub.s32 0, %v2583
        %v2585 = vrot.slane %v2580, %v2584
        %v2587 = vmul.f32 %v2548, %v2585
        %v2588 = vmul.f32 %v2549, %v2585
        %v2589 = vmul.f32 %v2550, %v2585
        %v2590 = vmul.f32 %v2551, %v2585
        %v2591 = vmul.f32 %v2552, %v2585
        %v2592 = vmul.f32 %v2553, %v2585
        %v2593 = vmul.f32 %v2554, %v2585
        %v2594 = vmul.f32 %v2555, %v2585
        %v2595 = vmul.f32 %v2556, %v2585
        %v2596 = vmul.f32 %v2557, %v2585
        %v2597 = vmul.f32 %v2558, %v2585
        %v2598 = vmul.f32 %v2559, %v2585
        %v2599 = vmul.f32 %v2560, %v2585
        %v2600 = vmul.f32 %v2561, %v2585
        %v2601 = vmul.f32 %v2562, %v2585
        %v2602 = vmul.f32 %v2563, %v2585
        %v2603 = vmul.f32 %v2564, %v2585
        %v2604 = vmul.f32 %v2565, %v2585
        %v2605 = vmul.f32 %v2566, %v2585
        %v2606 = vmul.f32 %v2567, %v2585
        %v2607 = vmul.f32 %v2568, %v2585
        %v2608 = vmul.f32 %v2569, %v2585
        %v2609 = vmul.f32 %v2570, %v2585
        %v2610 = vmul.f32 %v2571, %v2585
        %v2611 = vmul.f32 %v2572, %v2585
        %v2612 = vmul.f32 %v2573, %v2585
        %v2613 = vmul.f32 %v2574, %v2585
        %v2614 = vmul.f32 %v2575, %v2585
        %v2615 = vmul.f32 %v2576, %v2585
        %v2616 = vmul.f32 %v2577, %v2585
        %v2617 = vmul.f32 %v2578, %v2585
        %v2618 = vmul.f32 %v2579, %v2585
        %v2619 = vld [vmem:[#allocation14] sm:$0x1]
        %v2621 = vlaneseq
        %v2622 = vshrl.u32 %v2621, 7
        %v2623 = vsub.s32 0, %v2622
        %v2624 = vrot.slane %v2619, %v2623
        %v2626 = vadd.f32 %v2587, %v2624
        %v2627 = vadd.f32 %v2588, %v2624
        %v2628 = vadd.f32 %v2589, %v2624
        %v2629 = vadd.f32 %v2590, %v2624
        %v2630 = vadd.f32 %v2591, %v2624
        %v2631 = vadd.f32 %v2592, %v2624
        %v2632 = vadd.f32 %v2593, %v2624
        %v2633 = vadd.f32 %v2594, %v2624
        %v2634 = vadd.f32 %v2595, %v2624
        %v2635 = vadd.f32 %v2596, %v2624
        %v2636 = vadd.f32 %v2597, %v2624
        %v2637 = vadd.f32 %v2598, %v2624
        %v2638 = vadd.f32 %v2599, %v2624
        %v2639 = vadd.f32 %v2600, %v2624
        %v2640 = vadd.f32 %v2601, %v2624
        %v2641 = vadd.f32 %v2602, %v2624
        %v2642 = vadd.f32 %v2603, %v2624
        %v2643 = vadd.f32 %v2604, %v2624
        %v2644 = vadd.f32 %v2605, %v2624
        %v2645 = vadd.f32 %v2606, %v2624
        %v2646 = vadd.f32 %v2607, %v2624
        %v2647 = vadd.f32 %v2608, %v2624
        %v2648 = vadd.f32 %v2609, %v2624
        %v2649 = vadd.f32 %v2610, %v2624
        %v2650 = vadd.f32 %v2611, %v2624
        %v2651 = vadd.f32 %v2612, %v2624
        %v2652 = vadd.f32 %v2613, %v2624
        %v2653 = vadd.f32 %v2614, %v2624
        %v2654 = vadd.f32 %v2615, %v2624
        %v2655 = vadd.f32 %v2616, %v2624
        %v2656 = vadd.f32 %v2617, %v2624
        %v2657 = vadd.f32 %v2618, %v2624
        %v2658 = vld [vmem:[%s321] sm:$0xf]
        %v2659 = vld [vmem:[%s321 + $0x4] sm:$0xf]
        %v2660 = vld [vmem:[%s321 + $0x8] sm:$0xf]
        %v2661 = vld [vmem:[%s321 + $0xc] sm:$0xf]
        %v2662 = vld [vmem:[%s321 + $0x10] sm:$0xf]
        %v2663 = vld [vmem:[%s321 + $0x14] sm:$0xf]
        %v2664 = vld [vmem:[%s321 + $0x18] sm:$0xf]
        %v2665 = vld [vmem:[%s321 + $0x1c] sm:$0xf]
        %v2666 = vld [vmem:[%s321 + $0x20] sm:$0xf]
        %v2667 = vld [vmem:[%s321 + $0x24] sm:$0xf]
        %v2668 = vld [vmem:[%s321 + $0x28] sm:$0xf]
        %v2669 = vld [vmem:[%s321 + $0x2c] sm:$0xf]
        %v2670 = vld [vmem:[%s321 + $0x30] sm:$0xf]
        %v2671 = vld [vmem:[%s321 + $0x34] sm:$0xf]
        %v2672 = vld [vmem:[%s321 + $0x38] sm:$0xf]
        %v2673 = vld [vmem:[%s321 + $0x3c] sm:$0xf]
        %v2674 = vld [vmem:[%s321 + $0x40] sm:$0xf]
        %v2675 = vld [vmem:[%s321 + $0x44] sm:$0xf]
        %v2676 = vld [vmem:[%s321 + $0x48] sm:$0xf]
        %v2677 = vld [vmem:[%s321 + $0x4c] sm:$0xf]
        %v2678 = vld [vmem:[%s321 + $0x50] sm:$0xf]
        %v2679 = vld [vmem:[%s321 + $0x54] sm:$0xf]
        %v2680 = vld [vmem:[%s321 + $0x58] sm:$0xf]
        %v2681 = vld [vmem:[%s321 + $0x5c] sm:$0xf]
        %v2682 = vld [vmem:[%s321 + $0x60] sm:$0xf]
        %v2683 = vld [vmem:[%s321 + $0x64] sm:$0xf]
        %v2684 = vld [vmem:[%s321 + $0x68] sm:$0xf]
        %v2685 = vld [vmem:[%s321 + $0x6c] sm:$0xf]
        %v2686 = vld [vmem:[%s321 + $0x70] sm:$0xf]
        %v2687 = vld [vmem:[%s321 + $0x74] sm:$0xf]
        %v2688 = vld [vmem:[%s321 + $0x78] sm:$0xf]
        %v2689 = vld [vmem:[%s321 + $0x7c] sm:$0xf]
        %v2690 = vunpack.c.l.bf16 %v2658
        %v2691 = vunpack.c.l.bf16 %v2659
        %v2692 = vunpack.c.l.bf16 %v2660
        %v2693 = vunpack.c.l.bf16 %v2661
        %v2694 = vunpack.c.l.bf16 %v2662
        %v2695 = vunpack.c.l.bf16 %v2663
        %v2696 = vunpack.c.l.bf16 %v2664
        %v2697 = vunpack.c.l.bf16 %v2665
        %v2698 = vunpack.c.l.bf16 %v2666
        %v2699 = vunpack.c.l.bf16 %v2667
        %v2700 = vunpack.c.l.bf16 %v2668
        %v2701 = vunpack.c.l.bf16 %v2669
        %v2702 = vunpack.c.l.bf16 %v2670
        %v2703 = vunpack.c.l.bf16 %v2671
        %v2704 = vunpack.c.l.bf16 %v2672
        %v2705 = vunpack.c.l.bf16 %v2673
        %v2706 = vunpack.c.l.bf16 %v2674
        %v2707 = vunpack.c.l.bf16 %v2675
        %v2708 = vunpack.c.l.bf16 %v2676
        %v2709 = vunpack.c.l.bf16 %v2677
        %v2710 = vunpack.c.l.bf16 %v2678
        %v2711 = vunpack.c.l.bf16 %v2679
        %v2712 = vunpack.c.l.bf16 %v2680
        %v2713 = vunpack.c.l.bf16 %v2681
        %v2714 = vunpack.c.l.bf16 %v2682
        %v2715 = vunpack.c.l.bf16 %v2683
        %v2716 = vunpack.c.l.bf16 %v2684
        %v2717 = vunpack.c.l.bf16 %v2685
        %v2718 = vunpack.c.l.bf16 %v2686
        %v2719 = vunpack.c.l.bf16 %v2687
        %v2720 = vunpack.c.l.bf16 %v2688
        %v2721 = vunpack.c.l.bf16 %v2689
        %v2722 = vadd.f32 %v2626, %v2690
        %v2723 = vadd.f32 %v2627, %v2691
        %v2724 = vadd.f32 %v2628, %v2692
        %v2725 = vadd.f32 %v2629, %v2693
        %v2726 = vadd.f32 %v2630, %v2694
        %v2727 = vadd.f32 %v2631, %v2695
        %v2728 = vadd.f32 %v2632, %v2696
        %v2729 = vadd.f32 %v2633, %v2697
        %v2730 = vadd.f32 %v2634, %v2698
        %v2731 = vadd.f32 %v2635, %v2699
        %v2732 = vadd.f32 %v2636, %v2700
        %v2733 = vadd.f32 %v2637, %v2701
        %v2734 = vadd.f32 %v2638, %v2702
        %v2735 = vadd.f32 %v2639, %v2703
        %v2736 = vadd.f32 %v2640, %v2704
        %v2737 = vadd.f32 %v2641, %v2705
        %v2738 = vadd.f32 %v2642, %v2706
        %v2739 = vadd.f32 %v2643, %v2707
        %v2740 = vadd.f32 %v2644, %v2708
        %v2741 = vadd.f32 %v2645, %v2709
        %v2742 = vadd.f32 %v2646, %v2710
        %v2743 = vadd.f32 %v2647, %v2711
        %v2744 = vadd.f32 %v2648, %v2712
        %v2745 = vadd.f32 %v2649, %v2713
        %v2746 = vadd.f32 %v2650, %v2714
        %v2747 = vadd.f32 %v2651, %v2715
        %v2748 = vadd.f32 %v2652, %v2716
        %v2749 = vadd.f32 %v2653, %v2717
        %v2750 = vadd.f32 %v2654, %v2718
        %v2751 = vadd.f32 %v2655, %v2719
        %v2752 = vadd.f32 %v2656, %v2720
        %v2753 = vadd.f32 %v2657, %v2721
        %v2754 = vmax.f32 %v2722, 0.0
        %v2755 = vmax.f32 %v2723, 0.0
        %v2756 = vmax.f32 %v2724, 0.0
        %v2757 = vmax.f32 %v2725, 0.0
        %v2758 = vmax.f32 %v2726, 0.0
        %v2759 = vmax.f32 %v2727, 0.0
        %v2760 = vmax.f32 %v2728, 0.0
        %v2761 = vmax.f32 %v2729, 0.0
        %v2762 = vmax.f32 %v2730, 0.0
        %v2763 = vmax.f32 %v2731, 0.0
        %v2764 = vmax.f32 %v2732, 0.0
        %v2765 = vmax.f32 %v2733, 0.0
        %v2766 = vmax.f32 %v2734, 0.0
        %v2767 = vmax.f32 %v2735, 0.0
        %v2768 = vmax.f32 %v2736, 0.0
        %v2769 = vmax.f32 %v2737, 0.0
        %v2770 = vmax.f32 %v2738, 0.0
        %v2771 = vmax.f32 %v2739, 0.0
        %v2772 = vmax.f32 %v2740, 0.0
        %v2773 = vmax.f32 %v2741, 0.0
        %v2774 = vmax.f32 %v2742, 0.0
        %v2775 = vmax.f32 %v2743, 0.0
        %v2776 = vmax.f32 %v2744, 0.0
        %v2777 = vmax.f32 %v2745, 0.0
        %v2778 = vmax.f32 %v2746, 0.0
        %v2779 = vmax.f32 %v2747, 0.0
        %v2780 = vmax.f32 %v2748, 0.0
        %v2781 = vmax.f32 %v2749, 0.0
        %v2782 = vmax.f32 %v2750, 0.0
        %v2783 = vmax.f32 %v2751, 0.0
        %v2784 = vmax.f32 %v2752, 0.0
        %v2785 = vmax.f32 %v2753, 0.0
        %v2786 = vpack.c.bf16 %v2755, %v2754
        %v2787 = vpack.c.bf16 %v2757, %v2756
        %v2788 = vpack.c.bf16 %v2759, %v2758
        %v2789 = vpack.c.bf16 %v2761, %v2760
        %v2790 = vpack.c.bf16 %v2763, %v2762
        %v2791 = vpack.c.bf16 %v2765, %v2764
        %v2792 = vpack.c.bf16 %v2767, %v2766
        %v2793 = vpack.c.bf16 %v2769, %v2768
        %v2794 = vpack.c.bf16 %v2771, %v2770
        %v2795 = vpack.c.bf16 %v2773, %v2772
        %v2796 = vpack.c.bf16 %v2775, %v2774
        %v2797 = vpack.c.bf16 %v2777, %v2776
        %v2798 = vpack.c.bf16 %v2779, %v2778
        %v2799 = vpack.c.bf16 %v2781, %v2780
        %v2800 = vpack.c.bf16 %v2783, %v2782
        %v2801 = vpack.c.bf16 %v2785, %v2784
        %v2818 = vunpack.c.l.b16 %v2786
        %v2819 = vunpack.c.h.b16 %v2786
        %v2820 = vunpack.c.l.b16 %v2787
        %v2821 = vunpack.c.h.b16 %v2787
        %v2822 = vunpack.c.l.b16 %v2788
        %v2823 = vunpack.c.h.b16 %v2788
        %v2824 = vunpack.c.l.b16 %v2789
        %v2825 = vunpack.c.h.b16 %v2789
        %v2826 = vunpack.c.l.b16 %v2790
        %v2827 = vunpack.c.h.b16 %v2790
        %v2828 = vunpack.c.l.b16 %v2791
        %v2829 = vunpack.c.h.b16 %v2791
        %v2830 = vunpack.c.l.b16 %v2792
        %v2831 = vunpack.c.h.b16 %v2792
        %v2832 = vunpack.c.l.b16 %v2793
        %v2833 = vunpack.c.h.b16 %v2793
        %v2834 = vunpack.c.l.b16 %v2794
        %v2835 = vunpack.c.h.b16 %v2794
        %v2836 = vunpack.c.l.b16 %v2795
        %v2837 = vunpack.c.h.b16 %v2795
        %v2838 = vunpack.c.l.b16 %v2796
        %v2839 = vunpack.c.h.b16 %v2796
        %v2840 = vunpack.c.l.b16 %v2797
        %v2841 = vunpack.c.h.b16 %v2797
        %v2842 = vunpack.c.l.b16 %v2798
        %v2843 = vunpack.c.h.b16 %v2798
        %v2844 = vunpack.c.l.b16 %v2799
        %v2845 = vunpack.c.h.b16 %v2799
        %v2846 = vunpack.c.l.b16 %v2800
        %v2847 = vunpack.c.h.b16 %v2800
        %v2848 = vunpack.c.l.b16 %v2801
        %v2849 = vunpack.c.h.b16 %v2801
        %v2850 = vpack.c.b16 %v2818, %v2818
        %v2851 = vpack.c.b16 %v2819, %v2819
        %v2852 = vpack.c.b16 %v2820, %v2820
        %v2853 = vpack.c.b16 %v2821, %v2821
        %v2854 = vpack.c.b16 %v2822, %v2822
        %v2855 = vpack.c.b16 %v2823, %v2823
        %v2856 = vpack.c.b16 %v2824, %v2824
        %v2857 = vpack.c.b16 %v2825, %v2825
        %v2858 = vpack.c.b16 %v2826, %v2826
        %v2859 = vpack.c.b16 %v2827, %v2827
        %v2860 = vpack.c.b16 %v2828, %v2828
        %v2861 = vpack.c.b16 %v2829, %v2829
        %v2862 = vpack.c.b16 %v2830, %v2830
        %v2863 = vpack.c.b16 %v2831, %v2831
        %v2864 = vpack.c.b16 %v2832, %v2832
        %v2865 = vpack.c.b16 %v2833, %v2833
        %v2866 = vpack.c.b16 %v2834, %v2834
        %v2867 = vpack.c.b16 %v2835, %v2835
        %v2868 = vpack.c.b16 %v2836, %v2836
        %v2869 = vpack.c.b16 %v2837, %v2837
        %v2870 = vpack.c.b16 %v2838, %v2838
        %v2871 = vpack.c.b16 %v2839, %v2839
        %v2872 = vpack.c.b16 %v2840, %v2840
        %v2873 = vpack.c.b16 %v2841, %v2841
        %v2874 = vpack.c.b16 %v2842, %v2842
        %v2875 = vpack.c.b16 %v2843, %v2843
        %v2876 = vpack.c.b16 %v2844, %v2844
        %v2877 = vpack.c.b16 %v2845, %v2845
        %v2878 = vpack.c.b16 %v2846, %v2846
        %v2879 = vpack.c.b16 %v2847, %v2847
        %v2880 = vpack.c.b16 %v2848, %v2848
        %v2881 = vpack.c.b16 %v2849, %v2849
        %vm2914 = vcmask 27648
        %2915 = vst.msk [vmem:[%s375] sm:$0xf] %vm2914, %v2850
        %2916 = vst.msk [vmem:[%s375 + $0x4] sm:$0xf] %vm2914, %v2851
        %2917 = vst.msk [vmem:[%s375 + $0x8] sm:$0xf] %vm2914, %v2852
        %2918 = vst.msk [vmem:[%s375 + $0xc] sm:$0xf] %vm2914, %v2853
        %2919 = vst.msk [vmem:[%s375 + $0x10] sm:$0xf] %vm2914, %v2854
        %2920 = vst.msk [vmem:[%s375 + $0x14] sm:$0xf] %vm2914, %v2855
        %2921 = vst.msk [vmem:[%s375 + $0x18] sm:$0xf] %vm2914, %v2856
        %2922 = vst.msk [vmem:[%s375 + $0x1c] sm:$0xf] %vm2914, %v2857
        %2923 = vst.msk [vmem:[%s375 + $0x20] sm:$0xf] %vm2914, %v2858
        %2924 = vst.msk [vmem:[%s375 + $0x24] sm:$0xf] %vm2914, %v2859
        %2925 = vst.msk [vmem:[%s375 + $0x28] sm:$0xf] %vm2914, %v2860
        %2926 = vst.msk [vmem:[%s375 + $0x2c] sm:$0xf] %vm2914, %v2861
        %2927 = vst.msk [vmem:[%s375 + $0x30] sm:$0xf] %vm2914, %v2862
        %2928 = vst.msk [vmem:[%s375 + $0x34] sm:$0xf] %vm2914, %v2863
        %2929 = vst.msk [vmem:[%s375 + $0x38] sm:$0xf] %vm2914, %v2864
        %2930 = vst.msk [vmem:[%s375 + $0x3c] sm:$0xf] %vm2914, %v2865
        %2931 = vst.msk [vmem:[%s375 + $0x40] sm:$0xf] %vm2914, %v2866
        %2932 = vst.msk [vmem:[%s375 + $0x44] sm:$0xf] %vm2914, %v2867
        %2933 = vst.msk [vmem:[%s375 + $0x48] sm:$0xf] %vm2914, %v2868
        %2934 = vst.msk [vmem:[%s375 + $0x4c] sm:$0xf] %vm2914, %v2869
        %2935 = vst.msk [vmem:[%s375 + $0x50] sm:$0xf] %vm2914, %v2870
        %2936 = vst.msk [vmem:[%s375 + $0x54] sm:$0xf] %vm2914, %v2871
        %2937 = vst.msk [vmem:[%s375 + $0x58] sm:$0xf] %vm2914, %v2872
        %2938 = vst.msk [vmem:[%s375 + $0x5c] sm:$0xf] %vm2914, %v2873
        %2939 = vst.msk [vmem:[%s375 + $0x60] sm:$0xf] %vm2914, %v2874
        %2940 = vst.msk [vmem:[%s375 + $0x64] sm:$0xf] %vm2914, %v2875
        %2941 = vst.msk [vmem:[%s375 + $0x68] sm:$0xf] %vm2914, %v2876
        %2942 = vst.msk [vmem:[%s375 + $0x6c] sm:$0xf] %vm2914, %v2877
        %2943 = vst.msk [vmem:[%s375 + $0x70] sm:$0xf] %vm2914, %v2878
        %2944 = vst.msk [vmem:[%s375 + $0x74] sm:$0xf] %vm2914, %v2879
        %2945 = vst.msk [vmem:[%s375 + $0x78] sm:$0xf] %vm2914, %v2880
        %2946 = vst.msk [vmem:[%s375 + $0x7c] sm:$0xf] %vm2914, %v2881
        %s2947 = sand.u32 %s187, 1
        %s2948 = scalar_lea.sflag [#allocation5], %s2947
        %s2949 = sand.u32 %s187, 1
        %s2950 = smul.addr %s2949, 128
        %s2951 = scalar_lea.vmem [#allocation15], %s2950
        // Predicated region
        $region77: #{tpu_custom_call.1} parent=47 // pred_check
          %p2952 = pneg %p197
        $region78: #{tpu_custom_call.1} parent=47 // pred_check_branch
          %2954 = sbr.rel (%p2952) target = $region80
        $region79: #{tpu_custom_call.1} parent=47 // pred_region
          %s2956 = ssub.s32 2048, 2048
          %2957 = vsyncadd %s2948, %s2956
          %s2958 = smul.addr %s27, 32
          %s2959 = smul.addr %s2958, 64
          %s2960 = scalar_lea.hbm %s7, %s2959
          %s2961 = sshll.u32 %s2951, 4
          %s2962 = int_to_ptr.vmem [resolvable:$true] %s2961
          %2967 = dma.vmem_to_hbm [thread:$0]  %s2962, 2048, %s2960, %s2948, 64, 64, 4
        $region80: #{tpu_custom_call.1} parent=47 // pred_fallthru
          _
      $region48: #{tpu_custom_call.1} parent=5 // pred_fallthru
        _
      %p2968 = scmp.le.s32.totalorder 2, %s22
      // Predicated region
      $region81: #{tpu_custom_call.1} parent=5 // pred_check
        %p2969 = pneg %p2968
      $region82: #{tpu_custom_call.1} parent=5 // pred_check_branch
        %2971 = sbr.rel (%p2969) target = $region84
      $region83: #{tpu_custom_call.1} parent=5 // pred_region
        %s2972 = ssub.s32 %s22, 2
        // Predicated region
        $region85: #{tpu_custom_call.1} parent=83 // pred_check
          %p2973 = pneg %p203
        $region86: #{tpu_custom_call.1} parent=83 // pred_check_branch
          %2975 = sbr.rel (%p2973) target = $region88
        $region87: #{tpu_custom_call.1} parent=83 // pred_region
          %s2976 = sand.u32 %s188, 1
          %s2977 = scalar_lea.sflag [#allocation5], %s2976
          %s2978 = sand.u32 %s188, 1
          %s2979 = smul.addr %s2978, 128
          %s2980 = scalar_lea.vmem [#allocation15], %s2979
          %2981 = dma.done %s2977, 2048
        $region88: #{tpu_custom_call.1} parent=83 // pred_fallthru
          _
      $region84: #{tpu_custom_call.1} parent=5 // pred_fallthru
        _
    $region6: #{tpu_custom_call.1} parent=1 // loop_footer
      %s26 = sadd.s32 1, %s22
    $region7: #{tpu_custom_call.1} parent=1 // loop_footer_branch
      %21 = sbr.rel target = $region3
    $region8: #{tpu_custom_call.1} parent=1 // loop_exit
      _
    %2982 = vsyncpa [#allocation4], 1
    %s2983 = scalar_lea.sflag [#allocation4], 1
    %2984 = vsyncpa %s2983, 1
    %2985 = vsyncpa [#allocation7], 1
    %2986 = vsyncpa [#allocation10], 1
    %2987 = vsyncpa [#allocation13], 1
    %2988 = vsyncpa [#allocation5], 1
    %s2989 = scalar_lea.sflag [#allocation5], 1
    %2990 = vsyncpa %s2989, 1

</llo_original>
